<compile_context>
chip_gen: v5e
topology: v5e:2x2
jax: 0.10.0
libtpu: 0.0.40
codegen_flags: <defaults>
</compile_context>

<pallas_src>
import functools

import jax
import jax.numpy as jnp
import numpy as np
from jax.experimental import pallas as pl
from jax.experimental.pallas import tpu as pltpu


# ----------------------------- Pallas kernel --------------------------------


def _slstm_kernel(x_ref, wx_ref, wh_ref, b_ref, out_ref, hT_ref, cT_ref,
                  h_st, c_st, gx_st, *, hidden_size, block_t):
    """One grid step == one (batch tile, block of Tt timesteps).

    Shapes (per grid step, time-major):
      x_ref  : (Tt, Bt, I)       input block
      wx_ref : (I, 8H)           packed input->gates weights (both directions)
      wh_ref : (2H, 8H)          packed hidden->gates weights (block-diag over dir)
      b_ref  : (1, 8H)           packed gate bias
      out_ref: (Tt, Bt, 2H)      per-step cat(h_fwd, h_bwd)
      hT_ref : (Bt, 2H)          final hidden state (written on last time block)
      cT_ref : (Bt, 2H)          final cell state
      h_st   : (Bt, 2H)  VMEM    recurrent h state  ([h_fwd | h_bwd] on lanes)
      c_st   : (Bt, 2H)  VMEM    recurrent c state
      gx_st  : (Tt, Bt, 8H) VMEM staged input->gate contributions
    """
    H = hidden_size
    G = 2 * H                      # per-gate group width: [dir_fwd | dir_bwd]
    Tt = block_t
    tb = pl.program_id(1)

    # Fresh recurrent state at the start of each batch tile's time sweep.
    @pl.when(tb == 0)
    def _():
        h_st[...] = jnp.zeros_like(h_st)
        c_st[...] = jnp.zeros_like(c_st)

    _, Bt, Ii = x_ref.shape

    # ---- input->gates for ALL Tt timesteps at once: one wide MXU call ------
    # (For very small I this could be I broadcast-FMAs on the VPU instead; it
    #  is hoisted out of the recurrence so it is off the critical path.)
    x_blk = x_ref[...].reshape(Tt * Bt, Ii)                          # free view (Bt%8==0)
    gx = (jnp.dot(x_blk, wx_ref[...],
                  preferred_element_type=jnp.float32)
          + b_ref[...])                                              # bias folded once
    gx_st[...] = gx.reshape(Tt, Bt, 4 * G)                           # (Tt, Bt, 8H)

    wh = wh_ref[...]               # (2H, 8H), block-diagonal over directions

    def step(j, carry):
        h, c = carry
        # hidden->gates for BOTH directions in a single MXU call.
        gates = gx_st[j] + jnp.dot(h.astype(wh.dtype), wh,
                                   preferred_element_type=jnp.float32)  # (Bt, 8H)

        # gate column order is [i | f | o | c~]: one sigmoid-via-tanh pass over
        # the contiguous 6H slab, full tanh only on the c~ group.
        sg = 0.5 * (jnp.tanh(0.5 * gates[:, :3 * G]) + 1.0)
        i_g = sg[:, 0 * G:1 * G]
        f_g = sg[:, 1 * G:2 * G]
        o_g = sg[:, 2 * G:3 * G]
        c_t = jnp.tanh(gates[:, 3 * G:4 * G])

        c = f_g * c + i_g * c_t
        h = o_g * jnp.tanh(c)

        # Time-major: one contiguous (Bt, 2H) slab store per step.
        out_ref[j] = h.astype(out_ref.dtype)
        return h, c

    h0 = h_st[...]
    c0 = c_st[...]
    if Tt <= 16:
        # Short blocks: static unroll keeps full LLO scheduling visibility.
        h, c = h0, c0
        for j in range(Tt):
            h, c = step(j, (h, c))
    else:
        # Long blocks: bounded live ranges / vreg pressure via fori_loop.
        h, c = jax.lax.fori_loop(0, Tt, step, (h0, c0), unroll=4)

    h_st[...] = h
    c_st[...] = c

    # Final (h_T, c_T) only stored once, on the last time block.
    @pl.when(tb == pl.num_programs(1) - 1)
    def _():
        hT_ref[...] = h
        cT_ref[...] = c


# --------------------------- parameter packing -------------------------------


def _pack_params(wx, wh, b, hidden_size, dtype):
    """Pack per-direction gate weights into single fused matrices.

    Inputs use gate order [i | f | c~ | o] along the 4H axis (PyTorch module
    order).  Packed column layout is gate-group-major, direction-minor, with
    gate order [i | f | o | c~]:
      [i_fwd i_bwd | f_fwd f_bwd | o_fwd o_bwd | c~_fwd c~_bwd], each H wide.
    The hidden->gates matrix is block-diagonal over directions (h_fwd only
    feeds the forward-direction gate columns), so one matmul serves both cells.
    """
    H = hidden_size
    I = wx.shape[1]
    perm = jnp.array([0, 1, 3, 2])           # [i, f, c~, o] -> [i, f, o, c~]

    wx_g = jnp.take(wx.reshape(2, I, 4, H), perm, axis=2)   # (dir, in,  gate, H)
    wh_g = jnp.take(wh.reshape(2, H, 4, H), perm, axis=2)   # (dir, hid, gate, H)
    b_g = jnp.take(b.reshape(2, 4, H), perm, axis=1)        # (dir, gate, H)

    wx_p = jnp.transpose(wx_g, (1, 2, 0, 3)).reshape(I, 8 * H)       # (I, 8H)
    b_p = jnp.transpose(b_g, (1, 0, 2)).reshape(1, 8 * H)            # (1, 8H)

    wh_p = jnp.zeros((2, H, 4, 2, H), dtype=wh.dtype)
    wh_p = wh_p.at[0, :, :, 0, :].set(wh_g[0])
    wh_p = wh_p.at[1, :, :, 1, :].set(wh_g[1])
    wh_p = wh_p.reshape(2 * H, 8 * H)                                # (2H, 8H)

    return wx_p.astype(dtype), wh_p.astype(dtype), b_p.astype(dtype)


# ------------------------------- wrapper --------------------------------------


def slstm_forward(x, wx, wh, b, *, hidden_size, block_t=None, block_b=None,
                  param_dtype=jnp.float32):
    """Bidirectional single-layer sLSTM forward.

    x  : (B, T, I)  float32
    wx : (2, I, 4H) float32   gate order along last axis: [i | f | c~ | o]
    wh : (2, H, 4H) float32
    b  : (2, 4H)    float32
    returns: output (B, T, 2H), (h_T, c_T) each (2, B, H)
    """
    B, T, I = x.shape
    H = hidden_size
    Tt = T if block_t is None else block_t
    Bt = B if block_b is None else block_b   # full batch per tile by default
    assert T % Tt == 0 and B % Bt == 0
    assert Bt % 8 == 0, "batch tile must be a sublane multiple (free reshapes)"

    wx_p, wh_p, b_p = _pack_params(wx, wh, b, H, param_dtype)

    # Time-major layout so per-step kernel accesses are leading-axis slabs.
    x_tm = jnp.swapaxes(x, 0, 1).astype(param_dtype)       # (T, B, I)

    kernel = functools.partial(_slstm_kernel, hidden_size=H, block_t=Tt)

    out_tm, hT, cT = pl.pallas_call(
        kernel,
        out_shape=(
            jax.ShapeDtypeStruct((T, B, 2 * H), jnp.float32),
            jax.ShapeDtypeStruct((B, 2 * H), jnp.float32),
            jax.ShapeDtypeStruct((B, 2 * H), jnp.float32),
        ),
        grid=(B // Bt, T // Tt),
        in_specs=[
            pl.BlockSpec((Tt, Bt, I), lambda bb, tb: (tb, bb, 0)),      # x block
            pl.BlockSpec((I, 8 * H), lambda bb, tb: (0, 0)),            # wx (resident)
            pl.BlockSpec((2 * H, 8 * H), lambda bb, tb: (0, 0)),        # wh (resident)
            pl.BlockSpec((1, 8 * H), lambda bb, tb: (0, 0)),            # bias (resident)
        ],
        out_specs=(
            pl.BlockSpec((Tt, Bt, 2 * H), lambda bb, tb: (tb, bb, 0)),  # outputs
            pl.BlockSpec((Bt, 2 * H), lambda bb, tb: (bb, 0)),          # final h
            pl.BlockSpec((Bt, 2 * H), lambda bb, tb: (bb, 0)),          # final c
        ),
        scratch_shapes=[
            pltpu.VMEM((Bt, 2 * H), jnp.float32),        # recurrent h state
            pltpu.VMEM((Bt, 2 * H), jnp.float32),        # recurrent c state
            pltpu.VMEM((Tt, Bt, 8 * H), jnp.float32),    # staged input->gate block
        ],
        compiler_params=pltpu.CompilerParams(
            # batch tiles are independent (2nd TC on v7x when B//Bt >= 2);
            # time is the recurrence -> must stay "arbitrary" and innermost.
            dimension_semantics=("parallel", "arbitrary"),
        ),
    )(x_tm, wx_p, wh_p, b_p)

    out = jnp.swapaxes(out_tm, 0, 1)                        # back to (B, T, 2H)
    # Tiny (B, 2H) reshuffles to the PyTorch (num_dirs, B, H) final-state layout.
    h_T = jnp.swapaxes(hT.reshape(B, 2, H), 0, 1)
    c_T = jnp.swapaxes(cT.reshape(B, 2, H), 0, 1)
    return out, (h_T, c_T)


# --------------------------- pure-JAX reference ------------------------------


def slstm_reference(x, wx, wh, b, *, hidden_size):
    B, T, I = x.shape
    H = hidden_size
    h = jnp.zeros((2, B, H), jnp.float32)
    c = jnp.zeros((2, B, H), jnp.float32)
    outs = []
    for t in range(T):
        x_t = x[:, t, :]
        h_new, c_new = [], []
        for d in range(2):
            gates = x_t @ wx[d] + h[d] @ wh[d] + b[d][None, :]
            i_g = jax.nn.sigmoid(gates[:, 0 * H:1 * H])
            f_g = jax.nn.sigmoid(gates[:, 1 * H:2 * H])
            c_t = jnp.tanh(gates[:, 2 * H:3 * H])
            o_g = jax.nn.sigmoid(gates[:, 3 * H:4 * H])
            cn = f_g * c[d] + i_g * c_t
            hn = o_g * jnp.tanh(cn)
            h_new.append(hn)
            c_new.append(cn)
        h = jnp.stack(h_new)
        c = jnp.stack(c_new)
        outs.append(jnp.concatenate([h[0], h[1]], axis=1))
    return jnp.stack(outs, axis=1), (h, c)


# ----------------------------------- main ------------------------------------


if __name__ == "__main__":
    # batch, seq, input_size (4 features F1..F4), hidden_size (as in the module)
    B, T, I, H = 16, 16, 4, 16
    Bt, Tt = 16, 8         # full-batch tile (throughput comes from rows);
                           # Tt=8 still exercises the cross-block state carry

    key = jax.random.PRNGKey(0)
    kx, kwx, kwh, kb = jax.random.split(key, 4)

    x = jax.random.uniform(kx, (B, T, I), jnp.float32)  # MinMax-scaled-like inputs

    # Deterministic parameter init, matching nn.Linear(I+H, H) fan-in scaling.
    bound = 1.0 / np.sqrt(I + H)
    wx = jax.random.uniform(kwx, (2, I, 4 * H), jnp.float32, -bound, bound)
    wh = jax.random.uniform(kwh, (2, H, 4 * H), jnp.float32, -bound, bound)
    b = jax.random.uniform(kb, (2, 4 * H), jnp.float32, -bound, bound)

    out, (h_T, c_T) = slstm_forward(x, wx, wh, b, hidden_size=H,
                                    block_t=Tt, block_b=Bt)
    jax.block_until_ready(out)
    jax.block_until_ready(h_T)
    jax.block_until_ready(c_T)

    out_ref, (h_ref, c_ref) = slstm_reference(x, wx, wh, b, hidden_size=H)

    np.testing.assert_allclose(np.asarray(out), np.asarray(out_ref),
                               rtol=1e-4, atol=1e-5)
    np.testing.assert_allclose(np.asarray(h_T), np.asarray(h_ref),
                               rtol=1e-4, atol=1e-5)
    np.testing.assert_allclose(np.asarray(c_T), np.asarray(c_ref),
                               rtol=1e-4, atol=1e-5)

    print("KERNEL_OK")
</pallas_src>

<mosaic_0001>
module attributes {stable_mosaic.version = 11 : i64} {
  func.func @_slstm_kernel(%arg0: i32, %arg1: i32, %arg2: memref<8x16x4xf32, #tpu.memory_space<vmem>>, %arg3: memref<4x128xf32, #tpu.memory_space<vmem>>, %arg4: memref<32x128xf32, #tpu.memory_space<vmem>>, %arg5: memref<1x128xf32, #tpu.memory_space<vmem>>, %arg6: memref<8x16x32xf32, #tpu.memory_space<vmem>>, %arg7: memref<16x32xf32, #tpu.memory_space<vmem>>, %arg8: memref<16x32xf32, #tpu.memory_space<vmem>>, %arg9: memref<16x32xf32, #tpu.memory_space<vmem>>, %arg10: memref<16x32xf32, #tpu.memory_space<vmem>>, %arg11: memref<8x16x128xf32, #tpu.memory_space<vmem>>) attributes {dimension_semantics = [#tpu.dimension_semantics<parallel>, #tpu.dimension_semantics<arbitrary>], iteration_bounds = array<i64: 1, 2>, scalar_prefetch = 0 : i64, scratch_operands = 3 : i64, tpu.core_type = #tpu.core_type<tc>, window_params = [{transform_indices = @transform_0, window_bounds = array<i64: 8, 16, 4>}, {pipeline_mode = #tpu.pipeline_mode<synchronous>, transform_indices = @transform_1, window_bounds = array<i64: 4, 128>}, {pipeline_mode = #tpu.pipeline_mode<synchronous>, transform_indices = @transform_2, window_bounds = array<i64: 32, 128>}, {pipeline_mode = #tpu.pipeline_mode<synchronous>, transform_indices = @transform_3, window_bounds = array<i64: 1, 128>}, {transform_indices = @transform_4, window_bounds = array<i64: 8, 16, 32>}, {transform_indices = @transform_5, window_bounds = array<i64: 16, 32>}, {transform_indices = @transform_6, window_bounds = array<i64: 16, 32>}]} {
    %c0_i32 = arith.constant 0 : i32
    %0 = arith.cmpi eq, %arg1, %c0_i32 : i32
    %1 = arith.extui %0 : i1 to i32
    %c0_i32_0 = arith.constant 0 : i32
    %2 = arith.cmpi ne, %1, %c0_i32_0 : i32
    scf.if %2 {
      %cst_94 = arith.constant 0.000000e+00 : f32
      %220 = vector.broadcast %cst_94 : f32 to vector<16x32xf32>
      %c0_95 = arith.constant 0 : index
      %c0_96 = arith.constant 0 : index
      %221 = vector.load %arg9[%c0_95, %c0_96] : memref<16x32xf32, #tpu.memory_space<vmem>>, vector<16x32xf32>
      tpu.vector_store %arg9[%c0_95, %c0_96], %220 {strides = array<i32>} : memref<16x32xf32, #tpu.memory_space<vmem>>, vector<16x32xf32>,
      %cst_97 = arith.constant 0.000000e+00 : f32
      %222 = vector.broadcast %cst_97 : f32 to vector<16x32xf32>
      %c0_98 = arith.constant 0 : index
      %c0_99 = arith.constant 0 : index
      %223 = vector.load %arg10[%c0_98, %c0_99] : memref<16x32xf32, #tpu.memory_space<vmem>>, vector<16x32xf32>
      tpu.vector_store %arg10[%c0_98, %c0_99], %222 {strides = array<i32>} : memref<16x32xf32, #tpu.memory_space<vmem>>, vector<16x32xf32>,
    } else {
    }
    %c0 = arith.constant 0 : index
    %c0_1 = arith.constant 0 : index
    %c0_2 = arith.constant 0 : index
    %3 = vector.load %arg2[%c0, %c0_1, %c0_2] : memref<8x16x4xf32, #tpu.memory_space<vmem>>, vector<8x16x4xf32>
    %4 = vector.shape_cast %3 : vector<8x16x4xf32> to vector<128x4xf32>
    %c0_3 = arith.constant 0 : index
    %c0_4 = arith.constant 0 : index
    %5 = vector.load %arg3[%c0_3, %c0_4] : memref<4x128xf32, #tpu.memory_space<vmem>>, vector<4x128xf32>
    %cst = arith.constant dense<0.000000e+00> : vector<128x128xf32>
    %6 = tpu.matmul %4, %5, %cst {dimension_numbers = #tpu.dot_dimension_numbers<[1], [0], [0], [1], [0, 0, 1, 1], [], []>} : vector<128x4xf32>, vector<4x128xf32>, vector<128x128xf32> -> vector<128x128xf32>
    %c0_5 = arith.constant 0 : index
    %c0_6 = arith.constant 0 : index
    %7 = vector.load %arg5[%c0_5, %c0_6] : memref<1x128xf32, #tpu.memory_space<vmem>>, vector<1x128xf32>
    %8 = vector.broadcast %7 : vector<1x128xf32> to vector<128x128xf32>
    %9 = arith.addf %6, %8 : vector<128x128xf32>
    %10 = vector.shape_cast %9 : vector<128x128xf32> to vector<8x16x128xf32>
    %c0_7 = arith.constant 0 : index
    %c0_8 = arith.constant 0 : index
    %c0_9 = arith.constant 0 : index
    %11 = vector.load %arg11[%c0_7, %c0_8, %c0_9] : memref<8x16x128xf32, #tpu.memory_space<vmem>>, vector<8x16x128xf32>
    tpu.vector_store %arg11[%c0_7, %c0_8, %c0_9], %10 {strides = array<i32>} : memref<8x16x128xf32, #tpu.memory_space<vmem>>, vector<8x16x128xf32>,
    %c0_10 = arith.constant 0 : index
    %c0_11 = arith.constant 0 : index
    %12 = vector.load %arg4[%c0_10, %c0_11] : memref<32x128xf32, #tpu.memory_space<vmem>>, vector<32x128xf32>
    %c0_12 = arith.constant 0 : index
    %c0_13 = arith.constant 0 : index
    %13 = vector.load %arg9[%c0_12, %c0_13] : memref<16x32xf32, #tpu.memory_space<vmem>>, vector<16x32xf32>
    %c0_14 = arith.constant 0 : index
    %c0_15 = arith.constant 0 : index
    %14 = vector.load %arg10[%c0_14, %c0_15] : memref<16x32xf32, #tpu.memory_space<vmem>>, vector<16x32xf32>
    %c0_16 = arith.constant 0 : index
    %c0_17 = arith.constant 0 : index
    %c0_18 = arith.constant 0 : index
    %15 = vector.load %arg11[%c0_16, %c0_17, %c0_18] : memref<8x16x128xf32, #tpu.memory_space<vmem>>, vector<1x16x128xf32>
    %16 = vector.shape_cast %15 : vector<1x16x128xf32> to vector<16x128xf32>
    %cst_19 = arith.constant dense<0.000000e+00> : vector<16x128xf32>
    %17 = tpu.matmul %13, %12, %cst_19 {dimension_numbers = #tpu.dot_dimension_numbers<[1], [0], [0], [1], [0, 0, 1, 1], [], []>} : vector<16x32xf32>, vector<32x128xf32>, vector<16x128xf32> -> vector<16x128xf32>
    %18 = arith.addf %16, %17 : vector<16x128xf32>
    %19 = vector.extract_strided_slice %18 {offsets = [0, 0], sizes = [16, 96], strides = [1, 1]} : vector<16x128xf32> to vector<16x96xf32>
    %cst_20 = arith.constant 5.000000e-01 : f32
    %20 = vector.broadcast %cst_20 : f32 to vector<16x96xf32>
    %21 = arith.mulf %20, %19 : vector<16x96xf32>
    %22 = math.tanh %21 : vector<16x96xf32>
    %cst_21 = arith.constant 1.000000e+00 : f32
    %23 = vector.broadcast %cst_21 : f32 to vector<16x96xf32>
    %24 = arith.addf %22, %23 : vector<16x96xf32>
    %cst_22 = arith.constant 5.000000e-01 : f32
    %25 = vector.broadcast %cst_22 : f32 to vector<16x96xf32>
    %26 = arith.mulf %25, %24 : vector<16x96xf32>
    %27 = vector.extract_strided_slice %26 {offsets = [0, 0], sizes = [16, 32], strides = [1, 1]} : vector<16x96xf32> to vector<16x32xf32>
    %28 = vector.extract_strided_slice %26 {offsets = [0, 32], sizes = [16, 32], strides = [1, 1]} : vector<16x96xf32> to vector<16x32xf32>
    %29 = vector.extract_strided_slice %26 {offsets = [0, 64], sizes = [16, 32], strides = [1, 1]} : vector<16x96xf32> to vector<16x32xf32>
    %30 = vector.extract_strided_slice %18 {offsets = [0, 96], sizes = [16, 32], strides = [1, 1]} : vector<16x128xf32> to vector<16x32xf32>
    %31 = math.tanh %30 : vector<16x32xf32>
    %32 = arith.mulf %28, %14 : vector<16x32xf32>
    %33 = arith.mulf %27, %31 : vector<16x32xf32>
    %34 = arith.addf %32, %33 : vector<16x32xf32>
    %35 = math.tanh %34 : vector<16x32xf32>
    %36 = arith.mulf %29, %35 : vector<16x32xf32>
    %c0_23 = arith.constant 0 : index
    %c0_24 = arith.constant 0 : index
    %c0_25 = arith.constant 0 : index
    %37 = vector.load %arg6[%c0_23, %c0_24, %c0_25] : memref<8x16x32xf32, #tpu.memory_space<vmem>>, vector<1x16x32xf32>
    %38 = vector.shape_cast %37 : vector<1x16x32xf32> to vector<16x32xf32>
    %39 = vector.shape_cast %36 : vector<16x32xf32> to vector<1x16x32xf32>
    tpu.vector_store %arg6[%c0_23, %c0_24, %c0_25], %39 {strides = array<i32>} : memref<8x16x32xf32, #tpu.memory_space<vmem>>, vector<1x16x32xf32>,
    %c1 = arith.constant 1 : index
    %c0_26 = arith.constant 0 : index
    %c0_27 = arith.constant 0 : index
    %40 = vector.load %arg11[%c1, %c0_26, %c0_27] : memref<8x16x128xf32, #tpu.memory_space<vmem>>, vector<1x16x128xf32>
    %41 = vector.shape_cast %40 : vector<1x16x128xf32> to vector<16x128xf32>
    %cst_28 = arith.constant dense<0.000000e+00> : vector<16x128xf32>
    %42 = tpu.matmul %36, %12, %cst_28 {dimension_numbers = #tpu.dot_dimension_numbers<[1], [0], [0], [1], [0, 0, 1, 1], [], []>} : vector<16x32xf32>, vector<32x128xf32>, vector<16x128xf32> -> vector<16x128xf32>
    %43 = arith.addf %41, %42 : vector<16x128xf32>
    %44 = vector.extract_strided_slice %43 {offsets = [0, 0], sizes = [16, 96], strides = [1, 1]} : vector<16x128xf32> to vector<16x96xf32>
    %cst_29 = arith.constant 5.000000e-01 : f32
    %45 = vector.broadcast %cst_29 : f32 to vector<16x96xf32>
    %46 = arith.mulf %45, %44 : vector<16x96xf32>
    %47 = math.tanh %46 : vector<16x96xf32>
    %cst_30 = arith.constant 1.000000e+00 : f32
    %48 = vector.broadcast %cst_30 : f32 to vector<16x96xf32>
    %49 = arith.addf %47, %48 : vector<16x96xf32>
    %cst_31 = arith.constant 5.000000e-01 : f32
    %50 = vector.broadcast %cst_31 : f32 to vector<16x96xf32>
    %51 = arith.mulf %50, %49 : vector<16x96xf32>
    %52 = vector.extract_strided_slice %51 {offsets = [0, 0], sizes = [16, 32], strides = [1, 1]} : vector<16x96xf32> to vector<16x32xf32>
    %53 = vector.extract_strided_slice %51 {offsets = [0, 32], sizes = [16, 32], strides = [1, 1]} : vector<16x96xf32> to vector<16x32xf32>
    %54 = vector.extract_strided_slice %51 {offsets = [0, 64], sizes = [16, 32], strides = [1, 1]} : vector<16x96xf32> to vector<16x32xf32>
    %55 = vector.extract_strided_slice %43 {offsets = [0, 96], sizes = [16, 32], strides = [1, 1]} : vector<16x128xf32> to vector<16x32xf32>
    %56 = math.tanh %55 : vector<16x32xf32>
    %57 = arith.mulf %53, %34 : vector<16x32xf32>
    %58 = arith.mulf %52, %56 : vector<16x32xf32>
    %59 = arith.addf %57, %58 : vector<16x32xf32>
    %60 = math.tanh %59 : vector<16x32xf32>
    %61 = arith.mulf %54, %60 : vector<16x32xf32>
    %c1_32 = arith.constant 1 : index
    %c0_33 = arith.constant 0 : index
    %c0_34 = arith.constant 0 : index
    %62 = vector.load %arg6[%c1_32, %c0_33, %c0_34] : memref<8x16x32xf32, #tpu.memory_space<vmem>>, vector<1x16x32xf32>
    %63 = vector.shape_cast %62 : vector<1x16x32xf32> to vector<16x32xf32>
    %64 = vector.shape_cast %61 : vector<16x32xf32> to vector<1x16x32xf32>
    tpu.vector_store %arg6[%c1_32, %c0_33, %c0_34], %64 {strides = array<i32>} : memref<8x16x32xf32, #tpu.memory_space<vmem>>, vector<1x16x32xf32>,
    %c2 = arith.constant 2 : index
    %c0_35 = arith.constant 0 : index
    %c0_36 = arith.constant 0 : index
    %65 = vector.load %arg11[%c2, %c0_35, %c0_36] : memref<8x16x128xf32, #tpu.memory_space<vmem>>, vector<1x16x128xf32>
    %66 = vector.shape_cast %65 : vector<1x16x128xf32> to vector<16x128xf32>
    %cst_37 = arith.constant dense<0.000000e+00> : vector<16x128xf32>
    %67 = tpu.matmul %61, %12, %cst_37 {dimension_numbers = #tpu.dot_dimension_numbers<[1], [0], [0], [1], [0, 0, 1, 1], [], []>} : vector<16x32xf32>, vector<32x128xf32>, vector<16x128xf32> -> vector<16x128xf32>
    %68 = arith.addf %66, %67 : vector<16x128xf32>
    %69 = vector.extract_strided_slice %68 {offsets = [0, 0], sizes = [16, 96], strides = [1, 1]} : vector<16x128xf32> to vector<16x96xf32>
    %cst_38 = arith.constant 5.000000e-01 : f32
    %70 = vector.broadcast %cst_38 : f32 to vector<16x96xf32>
    %71 = arith.mulf %70, %69 : vector<16x96xf32>
    %72 = math.tanh %71 : vector<16x96xf32>
    %cst_39 = arith.constant 1.000000e+00 : f32
    %73 = vector.broadcast %cst_39 : f32 to vector<16x96xf32>
    %74 = arith.addf %72, %73 : vector<16x96xf32>
    %cst_40 = arith.constant 5.000000e-01 : f32
    %75 = vector.broadcast %cst_40 : f32 to vector<16x96xf32>
    %76 = arith.mulf %75, %74 : vector<16x96xf32>
    %77 = vector.extract_strided_slice %76 {offsets = [0, 0], sizes = [16, 32], strides = [1, 1]} : vector<16x96xf32> to vector<16x32xf32>
    %78 = vector.extract_strided_slice %76 {offsets = [0, 32], sizes = [16, 32], strides = [1, 1]} : vector<16x96xf32> to vector<16x32xf32>
    %79 = vector.extract_strided_slice %76 {offsets = [0, 64], sizes = [16, 32], strides = [1, 1]} : vector<16x96xf32> to vector<16x32xf32>
    %80 = vector.extract_strided_slice %68 {offsets = [0, 96], sizes = [16, 32], strides = [1, 1]} : vector<16x128xf32> to vector<16x32xf32>
    %81 = math.tanh %80 : vector<16x32xf32>
    %82 = arith.mulf %78, %59 : vector<16x32xf32>
    %83 = arith.mulf %77, %81 : vector<16x32xf32>
    %84 = arith.addf %82, %83 : vector<16x32xf32>
    %85 = math.tanh %84 : vector<16x32xf32>
    %86 = arith.mulf %79, %85 : vector<16x32xf32>
    %c2_41 = arith.constant 2 : index
    %c0_42 = arith.constant 0 : index
    %c0_43 = arith.constant 0 : index
    %87 = vector.load %arg6[%c2_41, %c0_42, %c0_43] : memref<8x16x32xf32, #tpu.memory_space<vmem>>, vector<1x16x32xf32>
    %88 = vector.shape_cast %87 : vector<1x16x32xf32> to vector<16x32xf32>
    %89 = vector.shape_cast %86 : vector<16x32xf32> to vector<1x16x32xf32>
    tpu.vector_store %arg6[%c2_41, %c0_42, %c0_43], %89 {strides = array<i32>} : memref<8x16x32xf32, #tpu.memory_space<vmem>>, vector<1x16x32xf32>,
    %c3 = arith.constant 3 : index
    %c0_44 = arith.constant 0 : index
    %c0_45 = arith.constant 0 : index
    %90 = vector.load %arg11[%c3, %c0_44, %c0_45] : memref<8x16x128xf32, #tpu.memory_space<vmem>>, vector<1x16x128xf32>
    %91 = vector.shape_cast %90 : vector<1x16x128xf32> to vector<16x128xf32>
    %cst_46 = arith.constant dense<0.000000e+00> : vector<16x128xf32>
    %92 = tpu.matmul %86, %12, %cst_46 {dimension_numbers = #tpu.dot_dimension_numbers<[1], [0], [0], [1], [0, 0, 1, 1], [], []>} : vector<16x32xf32>, vector<32x128xf32>, vector<16x128xf32> -> vector<16x128xf32>
    %93 = arith.addf %91, %92 : vector<16x128xf32>
    %94 = vector.extract_strided_slice %93 {offsets = [0, 0], sizes = [16, 96], strides = [1, 1]} : vector<16x128xf32> to vector<16x96xf32>
    %cst_47 = arith.constant 5.000000e-01 : f32
    %95 = vector.broadcast %cst_47 : f32 to vector<16x96xf32>
    %96 = arith.mulf %95, %94 : vector<16x96xf32>
    %97 = math.tanh %96 : vector<16x96xf32>
    %cst_48 = arith.constant 1.000000e+00 : f32
    %98 = vector.broadcast %cst_48 : f32 to vector<16x96xf32>
    %99 = arith.addf %97, %98 : vector<16x96xf32>
    %cst_49 = arith.constant 5.000000e-01 : f32
    %100 = vector.broadcast %cst_49 : f32 to vector<16x96xf32>
    %101 = arith.mulf %100, %99 : vector<16x96xf32>
    %102 = vector.extract_strided_slice %101 {offsets = [0, 0], sizes = [16, 32], strides = [1, 1]} : vector<16x96xf32> to vector<16x32xf32>
    %103 = vector.extract_strided_slice %101 {offsets = [0, 32], sizes = [16, 32], strides = [1, 1]} : vector<16x96xf32> to vector<16x32xf32>
    %104 = vector.extract_strided_slice %101 {offsets = [0, 64], sizes = [16, 32], strides = [1, 1]} : vector<16x96xf32> to vector<16x32xf32>
    %105 = vector.extract_strided_slice %93 {offsets = [0, 96], sizes = [16, 32], strides = [1, 1]} : vector<16x128xf32> to vector<16x32xf32>
    %106 = math.tanh %105 : vector<16x32xf32>
    %107 = arith.mulf %103, %84 : vector<16x32xf32>
    %108 = arith.mulf %102, %106 : vector<16x32xf32>
    %109 = arith.addf %107, %108 : vector<16x32xf32>
    %110 = math.tanh %109 : vector<16x32xf32>
    %111 = arith.mulf %104, %110 : vector<16x32xf32>
    %c3_50 = arith.constant 3 : index
    %c0_51 = arith.constant 0 : index
    %c0_52 = arith.constant 0 : index
    %112 = vector.load %arg6[%c3_50, %c0_51, %c0_52] : memref<8x16x32xf32, #tpu.memory_space<vmem>>, vector<1x16x32xf32>
    %113 = vector.shape_cast %112 : vector<1x16x32xf32> to vector<16x32xf32>
    %114 = vector.shape_cast %111 : vector<16x32xf32> to vector<1x16x32xf32>
    tpu.vector_store %arg6[%c3_50, %c0_51, %c0_52], %114 {strides = array<i32>} : memref<8x16x32xf32, #tpu.memory_space<vmem>>, vector<1x16x32xf32>,
    %c4 = arith.constant 4 : index
    %c0_53 = arith.constant 0 : index
    %c0_54 = arith.constant 0 : index
    %115 = vector.load %arg11[%c4, %c0_53, %c0_54] : memref<8x16x128xf32, #tpu.memory_space<vmem>>, vector<1x16x128xf32>
    %116 = vector.shape_cast %115 : vector<1x16x128xf32> to vector<16x128xf32>
    %cst_55 = arith.constant dense<0.000000e+00> : vector<16x128xf32>
    %117 = tpu.matmul %111, %12, %cst_55 {dimension_numbers = #tpu.dot_dimension_numbers<[1], [0], [0], [1], [0, 0, 1, 1], [], []>} : vector<16x32xf32>, vector<32x128xf32>, vector<16x128xf32> -> vector<16x128xf32>
    %118 = arith.addf %116, %117 : vector<16x128xf32>
    %119 = vector.extract_strided_slice %118 {offsets = [0, 0], sizes = [16, 96], strides = [1, 1]} : vector<16x128xf32> to vector<16x96xf32>
    %cst_56 = arith.constant 5.000000e-01 : f32
    %120 = vector.broadcast %cst_56 : f32 to vector<16x96xf32>
    %121 = arith.mulf %120, %119 : vector<16x96xf32>
    %122 = math.tanh %121 : vector<16x96xf32>
    %cst_57 = arith.constant 1.000000e+00 : f32
    %123 = vector.broadcast %cst_57 : f32 to vector<16x96xf32>
    %124 = arith.addf %122, %123 : vector<16x96xf32>
    %cst_58 = arith.constant 5.000000e-01 : f32
    %125 = vector.broadcast %cst_58 : f32 to vector<16x96xf32>
    %126 = arith.mulf %125, %124 : vector<16x96xf32>
    %127 = vector.extract_strided_slice %126 {offsets = [0, 0], sizes = [16, 32], strides = [1, 1]} : vector<16x96xf32> to vector<16x32xf32>
    %128 = vector.extract_strided_slice %126 {offsets = [0, 32], sizes = [16, 32], strides = [1, 1]} : vector<16x96xf32> to vector<16x32xf32>
    %129 = vector.extract_strided_slice %126 {offsets = [0, 64], sizes = [16, 32], strides = [1, 1]} : vector<16x96xf32> to vector<16x32xf32>
    %130 = vector.extract_strided_slice %118 {offsets = [0, 96], sizes = [16, 32], strides = [1, 1]} : vector<16x128xf32> to vector<16x32xf32>
    %131 = math.tanh %130 : vector<16x32xf32>
    %132 = arith.mulf %128, %109 : vector<16x32xf32>
    %133 = arith.mulf %127, %131 : vector<16x32xf32>
    %134 = arith.addf %132, %133 : vector<16x32xf32>
    %135 = math.tanh %134 : vector<16x32xf32>
    %136 = arith.mulf %129, %135 : vector<16x32xf32>
    %c4_59 = arith.constant 4 : index
    %c0_60 = arith.constant 0 : index
    %c0_61 = arith.constant 0 : index
    %137 = vector.load %arg6[%c4_59, %c0_60, %c0_61] : memref<8x16x32xf32, #tpu.memory_space<vmem>>, vector<1x16x32xf32>
    %138 = vector.shape_cast %137 : vector<1x16x32xf32> to vector<16x32xf32>
    %139 = vector.shape_cast %136 : vector<16x32xf32> to vector<1x16x32xf32>
    tpu.vector_store %arg6[%c4_59, %c0_60, %c0_61], %139 {strides = array<i32>} : memref<8x16x32xf32, #tpu.memory_space<vmem>>, vector<1x16x32xf32>,
    %c5 = arith.constant 5 : index
    %c0_62 = arith.constant 0 : index
    %c0_63 = arith.constant 0 : index
    %140 = vector.load %arg11[%c5, %c0_62, %c0_63] : memref<8x16x128xf32, #tpu.memory_space<vmem>>, vector<1x16x128xf32>
    %141 = vector.shape_cast %140 : vector<1x16x128xf32> to vector<16x128xf32>
    %cst_64 = arith.constant dense<0.000000e+00> : vector<16x128xf32>
    %142 = tpu.matmul %136, %12, %cst_64 {dimension_numbers = #tpu.dot_dimension_numbers<[1], [0], [0], [1], [0, 0, 1, 1], [], []>} : vector<16x32xf32>, vector<32x128xf32>, vector<16x128xf32> -> vector<16x128xf32>
    %143 = arith.addf %141, %142 : vector<16x128xf32>
    %144 = vector.extract_strided_slice %143 {offsets = [0, 0], sizes = [16, 96], strides = [1, 1]} : vector<16x128xf32> to vector<16x96xf32>
    %cst_65 = arith.constant 5.000000e-01 : f32
    %145 = vector.broadcast %cst_65 : f32 to vector<16x96xf32>
    %146 = arith.mulf %145, %144 : vector<16x96xf32>
    %147 = math.tanh %146 : vector<16x96xf32>
    %cst_66 = arith.constant 1.000000e+00 : f32
    %148 = vector.broadcast %cst_66 : f32 to vector<16x96xf32>
    %149 = arith.addf %147, %148 : vector<16x96xf32>
    %cst_67 = arith.constant 5.000000e-01 : f32
    %150 = vector.broadcast %cst_67 : f32 to vector<16x96xf32>
    %151 = arith.mulf %150, %149 : vector<16x96xf32>
    %152 = vector.extract_strided_slice %151 {offsets = [0, 0], sizes = [16, 32], strides = [1, 1]} : vector<16x96xf32> to vector<16x32xf32>
    %153 = vector.extract_strided_slice %151 {offsets = [0, 32], sizes = [16, 32], strides = [1, 1]} : vector<16x96xf32> to vector<16x32xf32>
    %154 = vector.extract_strided_slice %151 {offsets = [0, 64], sizes = [16, 32], strides = [1, 1]} : vector<16x96xf32> to vector<16x32xf32>
    %155 = vector.extract_strided_slice %143 {offsets = [0, 96], sizes = [16, 32], strides = [1, 1]} : vector<16x128xf32> to vector<16x32xf32>
    %156 = math.tanh %155 : vector<16x32xf32>
    %157 = arith.mulf %153, %134 : vector<16x32xf32>
    %158 = arith.mulf %152, %156 : vector<16x32xf32>
    %159 = arith.addf %157, %158 : vector<16x32xf32>
    %160 = math.tanh %159 : vector<16x32xf32>
    %161 = arith.mulf %154, %160 : vector<16x32xf32>
    %c5_68 = arith.constant 5 : index
    %c0_69 = arith.constant 0 : index
    %c0_70 = arith.constant 0 : index
    %162 = vector.load %arg6[%c5_68, %c0_69, %c0_70] : memref<8x16x32xf32, #tpu.memory_space<vmem>>, vector<1x16x32xf32>
    %163 = vector.shape_cast %162 : vector<1x16x32xf32> to vector<16x32xf32>
    %164 = vector.shape_cast %161 : vector<16x32xf32> to vector<1x16x32xf32>
    tpu.vector_store %arg6[%c5_68, %c0_69, %c0_70], %164 {strides = array<i32>} : memref<8x16x32xf32, #tpu.memory_space<vmem>>, vector<1x16x32xf32>,
    %c6 = arith.constant 6 : index
    %c0_71 = arith.constant 0 : index
    %c0_72 = arith.constant 0 : index
    %165 = vector.load %arg11[%c6, %c0_71, %c0_72] : memref<8x16x128xf32, #tpu.memory_space<vmem>>, vector<1x16x128xf32>
    %166 = vector.shape_cast %165 : vector<1x16x128xf32> to vector<16x128xf32>
    %cst_73 = arith.constant dense<0.000000e+00> : vector<16x128xf32>
    %167 = tpu.matmul %161, %12, %cst_73 {dimension_numbers = #tpu.dot_dimension_numbers<[1], [0], [0], [1], [0, 0, 1, 1], [], []>} : vector<16x32xf32>, vector<32x128xf32>, vector<16x128xf32> -> vector<16x128xf32>
    %168 = arith.addf %166, %167 : vector<16x128xf32>
    %169 = vector.extract_strided_slice %168 {offsets = [0, 0], sizes = [16, 96], strides = [1, 1]} : vector<16x128xf32> to vector<16x96xf32>
    %cst_74 = arith.constant 5.000000e-01 : f32
    %170 = vector.broadcast %cst_74 : f32 to vector<16x96xf32>
    %171 = arith.mulf %170, %169 : vector<16x96xf32>
    %172 = math.tanh %171 : vector<16x96xf32>
    %cst_75 = arith.constant 1.000000e+00 : f32
    %173 = vector.broadcast %cst_75 : f32 to vector<16x96xf32>
    %174 = arith.addf %172, %173 : vector<16x96xf32>
    %cst_76 = arith.constant 5.000000e-01 : f32
    %175 = vector.broadcast %cst_76 : f32 to vector<16x96xf32>
    %176 = arith.mulf %175, %174 : vector<16x96xf32>
    %177 = vector.extract_strided_slice %176 {offsets = [0, 0], sizes = [16, 32], strides = [1, 1]} : vector<16x96xf32> to vector<16x32xf32>
    %178 = vector.extract_strided_slice %176 {offsets = [0, 32], sizes = [16, 32], strides = [1, 1]} : vector<16x96xf32> to vector<16x32xf32>
    %179 = vector.extract_strided_slice %176 {offsets = [0, 64], sizes = [16, 32], strides = [1, 1]} : vector<16x96xf32> to vector<16x32xf32>
    %180 = vector.extract_strided_slice %168 {offsets = [0, 96], sizes = [16, 32], strides = [1, 1]} : vector<16x128xf32> to vector<16x32xf32>
    %181 = math.tanh %180 : vector<16x32xf32>
    %182 = arith.mulf %178, %159 : vector<16x32xf32>
    %183 = arith.mulf %177, %181 : vector<16x32xf32>
    %184 = arith.addf %182, %183 : vector<16x32xf32>
    %185 = math.tanh %184 : vector<16x32xf32>
    %186 = arith.mulf %179, %185 : vector<16x32xf32>
    %c6_77 = arith.constant 6 : index
    %c0_78 = arith.constant 0 : index
    %c0_79 = arith.constant 0 : index
    %187 = vector.load %arg6[%c6_77, %c0_78, %c0_79] : memref<8x16x32xf32, #tpu.memory_space<vmem>>, vector<1x16x32xf32>
    %188 = vector.shape_cast %187 : vector<1x16x32xf32> to vector<16x32xf32>
    %189 = vector.shape_cast %186 : vector<16x32xf32> to vector<1x16x32xf32>
    tpu.vector_store %arg6[%c6_77, %c0_78, %c0_79], %189 {strides = array<i32>} : memref<8x16x32xf32, #tpu.memory_space<vmem>>, vector<1x16x32xf32>,
    %c7 = arith.constant 7 : index
    %c0_80 = arith.constant 0 : index
    %c0_81 = arith.constant 0 : index
    %190 = vector.load %arg11[%c7, %c0_80, %c0_81] : memref<8x16x128xf32, #tpu.memory_space<vmem>>, vector<1x16x128xf32>
    %191 = vector.shape_cast %190 : vector<1x16x128xf32> to vector<16x128xf32>
    %cst_82 = arith.constant dense<0.000000e+00> : vector<16x128xf32>
    %192 = tpu.matmul %186, %12, %cst_82 {dimension_numbers = #tpu.dot_dimension_numbers<[1], [0], [0], [1], [0, 0, 1, 1], [], []>} : vector<16x32xf32>, vector<32x128xf32>, vector<16x128xf32> -> vector<16x128xf32>
    %193 = arith.addf %191, %192 : vector<16x128xf32>
    %194 = vector.extract_strided_slice %193 {offsets = [0, 0], sizes = [16, 96], strides = [1, 1]} : vector<16x128xf32> to vector<16x96xf32>
    %cst_83 = arith.constant 5.000000e-01 : f32
    %195 = vector.broadcast %cst_83 : f32 to vector<16x96xf32>
    %196 = arith.mulf %195, %194 : vector<16x96xf32>
    %197 = math.tanh %196 : vector<16x96xf32>
    %cst_84 = arith.constant 1.000000e+00 : f32
    %198 = vector.broadcast %cst_84 : f32 to vector<16x96xf32>
    %199 = arith.addf %197, %198 : vector<16x96xf32>
    %cst_85 = arith.constant 5.000000e-01 : f32
    %200 = vector.broadcast %cst_85 : f32 to vector<16x96xf32>
    %201 = arith.mulf %200, %199 : vector<16x96xf32>
    %202 = vector.extract_strided_slice %201 {offsets = [0, 0], sizes = [16, 32], strides = [1, 1]} : vector<16x96xf32> to vector<16x32xf32>
    %203 = vector.extract_strided_slice %201 {offsets = [0, 32], sizes = [16, 32], strides = [1, 1]} : vector<16x96xf32> to vector<16x32xf32>
    %204 = vector.extract_strided_slice %201 {offsets = [0, 64], sizes = [16, 32], strides = [1, 1]} : vector<16x96xf32> to vector<16x32xf32>
    %205 = vector.extract_strided_slice %193 {offsets = [0, 96], sizes = [16, 32], strides = [1, 1]} : vector<16x128xf32> to vector<16x32xf32>
    %206 = math.tanh %205 : vector<16x32xf32>
    %207 = arith.mulf %203, %184 : vector<16x32xf32>
    %208 = arith.mulf %202, %206 : vector<16x32xf32>
    %209 = arith.addf %207, %208 : vector<16x32xf32>
    %210 = math.tanh %209 : vector<16x32xf32>
    %211 = arith.mulf %204, %210 : vector<16x32xf32>
    %c7_86 = arith.constant 7 : index
    %c0_87 = arith.constant 0 : index
    %c0_88 = arith.constant 0 : index
    %212 = vector.load %arg6[%c7_86, %c0_87, %c0_88] : memref<8x16x32xf32, #tpu.memory_space<vmem>>, vector<1x16x32xf32>
    %213 = vector.shape_cast %212 : vector<1x16x32xf32> to vector<16x32xf32>
    %214 = vector.shape_cast %211 : vector<16x32xf32> to vector<1x16x32xf32>
    tpu.vector_store %arg6[%c7_86, %c0_87, %c0_88], %214 {strides = array<i32>} : memref<8x16x32xf32, #tpu.memory_space<vmem>>, vector<1x16x32xf32>,
    %c0_89 = arith.constant 0 : index
    %c0_90 = arith.constant 0 : index
    %215 = vector.load %arg9[%c0_89, %c0_90] : memref<16x32xf32, #tpu.memory_space<vmem>>, vector<16x32xf32>
    tpu.vector_store %arg9[%c0_89, %c0_90], %211 {strides = array<i32>} : memref<16x32xf32, #tpu.memory_space<vmem>>, vector<16x32xf32>,
    %c0_91 = arith.constant 0 : index
    %c0_92 = arith.constant 0 : index
    %216 = vector.load %arg10[%c0_91, %c0_92] : memref<16x32xf32, #tpu.memory_space<vmem>>, vector<16x32xf32>
    tpu.vector_store %arg10[%c0_91, %c0_92], %209 {strides = array<i32>} : memref<16x32xf32, #tpu.memory_space<vmem>>, vector<16x32xf32>,
    %c1_i32 = arith.constant 1 : i32
    %217 = arith.cmpi eq, %arg1, %c1_i32 : i32
    %218 = arith.extui %217 : i1 to i32
    %c0_i32_93 = arith.constant 0 : i32
    %219 = arith.cmpi ne, %218, %c0_i32_93 : i32
    scf.if %219 {
      %c0_94 = arith.constant 0 : index
      %c0_95 = arith.constant 0 : index
      %220 = vector.load %arg7[%c0_94, %c0_95] : memref<16x32xf32, #tpu.memory_space<vmem>>, vector<16x32xf32>
      tpu.vector_store %arg7[%c0_94, %c0_95], %211 {strides = array<i32>} : memref<16x32xf32, #tpu.memory_space<vmem>>, vector<16x32xf32>,
      %c0_96 = arith.constant 0 : index
      %c0_97 = arith.constant 0 : index
      %221 = vector.load %arg8[%c0_96, %c0_97] : memref<16x32xf32, #tpu.memory_space<vmem>>, vector<16x32xf32>
      tpu.vector_store %arg8[%c0_96, %c0_97], %209 {strides = array<i32>} : memref<16x32xf32, #tpu.memory_space<vmem>>, vector<16x32xf32>,
    } else {
    }
    return
  }
  func.func @transform_0(%arg0: i32, %arg1: i32) -> (i32, i32, i32) {
    %c0_i32 = arith.constant 0 : i32
    %c0_i32_0 = arith.constant 0 : i32
    return %arg1, %arg0, %c0_i32 : i32, i32, i32
  }
  func.func @transform_1(%arg0: i32, %arg1: i32) -> (i32, i32) {
    %c0_i32 = arith.constant 0 : i32
    %c0_i32_0 = arith.constant 0 : i32
    %c0_i32_1 = arith.constant 0 : i32
    return %c0_i32, %c0_i32_0 : i32, i32
  }
  func.func @transform_2(%arg0: i32, %arg1: i32) -> (i32, i32) {
    %c0_i32 = arith.constant 0 : i32
    %c0_i32_0 = arith.constant 0 : i32
    %c0_i32_1 = arith.constant 0 : i32
    return %c0_i32, %c0_i32_0 : i32, i32
  }
  func.func @transform_3(%arg0: i32, %arg1: i32) -> (i32, i32) {
    %c0_i32 = arith.constant 0 : i32
    %c0_i32_0 = arith.constant 0 : i32
    %c0_i32_1 = arith.constant 0 : i32
    return %c0_i32, %c0_i32_0 : i32, i32
  }
  func.func @transform_4(%arg0: i32, %arg1: i32) -> (i32, i32, i32) {
    %c0_i32 = arith.constant 0 : i32
    %c0_i32_0 = arith.constant 0 : i32
    return %arg1, %arg0, %c0_i32 : i32, i32, i32
  }
  func.func @transform_5(%arg0: i32, %arg1: i32) -> (i32, i32) {
    %c0_i32 = arith.constant 0 : i32
    %c0_i32_0 = arith.constant 0 : i32
    return %arg0, %c0_i32 : i32, i32
  }
  func.func @transform_6(%arg0: i32, %arg1: i32) -> (i32, i32) {
    %c0_i32 = arith.constant 0 : i32
    %c0_i32_0 = arith.constant 0 : i32
    return %arg0, %c0_i32 : i32, i32
  }
}

</mosaic_0001>

<llo_original>
// kernel: tpu_custom_call.1
$region0: #{tpu_custom_call.1}
  #allocation0 [shape = 'u32[]', space=smem, size = 0x4, offset = 0x4, fixed_abs, tag = 'smem constant byte address 0x4 - core index']
  #allocation1 [shape = 'u32[72,128]{1,0:T(1,128)}', space=vmem, size = 0x9000, scoped, tag = 'internal scratch']
  #allocation2 [shape = 'f32[16,32]{1,0:T(8,128)}', space=vmem, size = 0x2000, scoped, tag = 'scratch operand']
  #allocation3 [shape = 'f32[16,32]{1,0:T(8,128)}', space=vmem, size = 0x2000, scoped, tag = 'scratch operand']
  #allocation4 [shape = 'f32[8,16,128]{2,1,0:T(8,128)}', space=vmem, size = 0x10000, scoped, tag = 'scratch operand']
  %s0 = inlined_call_operand.vmem [shape: f32[16,16,4], index: 0, kind: input, shape index: {}]
  %s1 = inlined_call_operand.vmem [shape: f32[4,128], index: 1, kind: input, shape index: {}]
  %s2 = inlined_call_operand.vmem [shape: f32[32,128], index: 2, kind: input, shape index: {}]
  %s3 = inlined_call_operand.vmem [shape: f32[1,128], index: 3, kind: input, shape index: {}]
  %s4 = inlined_call_operand.hbm [shape: f32[16,16,32], index: 4, kind: output, shape index: {0}]
  %s5 = inlined_call_operand.hbm [shape: f32[16,32], index: 5, kind: output, shape index: {1}]
  %s6 = inlined_call_operand.hbm [shape: f32[16,32], index: 6, kind: output, shape index: {2}]
  %7 = xla_tuple %s4, %s5, %s6
  %s8 = sld [smem:[#allocation0]]
  $region73: #{tpu_custom_call.1} parent=0
    _
  %s10 = ssub.s32 1, %s8
  %s11 = scalar_select 0, %s10, %s8
  $region1: #{tpu_custom_call.1} parent=0
    #allocation5 [shape = 'u8[131072]{0}', space=vmem, size = 0x20000, scoped, tag = 'output window, operand 0']
    #allocation6 [shape = 's32[2]{0}', space=sflag, size = 0x8, scoped, tag = 'scoped memory for tpu_custom_call.1']
    #allocation7 [shape = 'u8[8192]{0}', space=vmem, size = 0x2000, scoped, tag = 'output window, operand 1, single buffered']
    #allocation8 [shape = 's32[1]{0}', space=sflag, size = 0x4, scoped, tag = 'scoped memory for tpu_custom_call.1']
    #allocation9 [shape = 'u8[8192]{0}', space=vmem, size = 0x2000, scoped, tag = 'output window, operand 2, single buffered']
    %12 = vsyncpa [#allocation6], 0
    %s13 = scalar_lea.sflag [#allocation6], 1
    %14 = vsyncpa %s13, 0
    %15 = vsyncpa [#allocation8], 0
    loop: start=0, step=1, limit=4
    $region2: #{tpu_custom_call.1} parent=1 // loop_pre_header
      _
    $region3: #{tpu_custom_call.1} parent=1 // loop_header
      %s17 = sphi 0, %s21
      %p18 = scmp.ge.s32.totalorder %s17, 4
      %s24 = sphi 0, %s36
      %s25 = sphi 0, %s32
      %s26 = sphi 0, %s24
      %s27 = sphi 0, %s25
      %s28 = sphi 0, %s26
      %s29 = sphi 0, %s27
      %s41 = sphi 0, %s43
      %s44 = sphi 0, %s41
      %s45 = sphi 0, %s44
      %s61 = sphi 0, %s45
      %s65 = sphi 0, %s65
      %s67 = sphi 0, %s65
      %s68 = sphi 0, %s67
      %s82 = sphi 0, %s68
      %s86 = sphi 0, %s86
      %s88 = sphi 0, %s86
      %s89 = sphi 0, %s88
      %s103 = sphi 0, %s89
      %s107 = sphi 0, %s107
      %s109 = sphi 0, %s107
      %s110 = sphi 0, %s109
      %s124 = sphi 0, %s110
      %s132 = sphi 0, %s134
      %s135 = sphi 0, %s132
      %s136 = sphi 0, %s135
      %s152 = sphi 0, %s136
      %s158 = sphi 0, %s160
      %s161 = sphi 0, %s158
      %s162 = sphi 0, %s161
      %s178 = sphi 0, %s162
      %s184 = sphi 0, %s186
      %s187 = sphi 0, %s184
      %s188 = sphi 0, %s187
      %s204 = sphi 0, %s188
    $region4: #{tpu_custom_call.1} parent=1 // loop_header_branch
      %20 = sbr.rel (%p18) target = $region8
    $region5: #{tpu_custom_call.1} parent=1 // loop_body
      %s22 = ssub.s32 %s17, 1
      %s23 = ssub.s32 %s17, 2
      %s30 = sadd.s32 1, %s25
      %p31 = scmp.ge.s32.totalorder %s30, 2
      %s32 = scalar_select %p31, 0, %s30
      %s33 = sadd.s32 1, %s24
      %s34 = scalar_select %p31, %s33, %s24
      %p35 = scmp.ge.s32.totalorder %s34, 1
      %s36 = scalar_select %p35, 0, %s34
      %s37 = ssub.s32 %s25, %s32
      %s38 = ssub.s32 %s24, %s36
      %s39 = sor.u32 %s37, %s38
      %p40 = scmp.eq.s32.totalorder %s39, 0
      %s42 = sadd.s32 %s41, 1
      %s43 = scalar_select %p40, %s41, %s42
      %p46 = pneg %p40
      %p47 = scmp.eq.s32.totalorder %s17, 1
      %p48 = por %p46, %p47
      %p49 = scmp.ne.s32.totalorder %s41, %s44
      %p50 = scmp.eq.s32.totalorder %s17, 0
      %p51 = por %p49, %p50
      %p52 = scmp.ne.s32.totalorder %s41, %s44
      %p53 = scmp.eq.s32.totalorder %s22, 1
      %p54 = por %p52, %p53
      %p55 = scmp.ne.s32.totalorder %s44, %s45
      %p56 = scmp.eq.s32.totalorder %s22, 0
      %p57 = por %p55, %p56
      %p58 = scmp.ne.s32.totalorder %s44, %s45
      %p59 = scmp.eq.s32.totalorder %s23, 1
      %p60 = por %p58, %p59
      %p62 = scmp.ne.s32.totalorder %s45, %s61
      %p63 = scmp.eq.s32.totalorder %s23, 0
      %p64 = por %p62, %p63
      %s66 = sadd.s32 %s65, 1
      %p69 = scmp.eq.s32.totalorder %s17, 1
      %p70 = scmp.ne.s32.totalorder %s65, %s67
      %p71 = scmp.eq.s32.totalorder %s17, 0
      %p72 = por %p70, %p71
      %p73 = scmp.ne.s32.totalorder %s65, %s67
      %p74 = scmp.eq.s32.totalorder %s22, 1
      %p75 = por %p73, %p74
      %p76 = scmp.ne.s32.totalorder %s67, %s68
      %p77 = scmp.eq.s32.totalorder %s22, 0
      %p78 = por %p76, %p77
      %p79 = scmp.ne.s32.totalorder %s67, %s68
      %p80 = scmp.eq.s32.totalorder %s23, 1
      %p81 = por %p79, %p80
      %p83 = scmp.ne.s32.totalorder %s68, %s82
      %p84 = scmp.eq.s32.totalorder %s23, 0
      %p85 = por %p83, %p84
      %s87 = sadd.s32 %s86, 1
      %p90 = scmp.eq.s32.totalorder %s17, 1
      %p91 = scmp.ne.s32.totalorder %s86, %s88
      %p92 = scmp.eq.s32.totalorder %s17, 0
      %p93 = por %p91, %p92
      %p94 = scmp.ne.s32.totalorder %s86, %s88
      %p95 = scmp.eq.s32.totalorder %s22, 1
      %p96 = por %p94, %p95
      %p97 = scmp.ne.s32.totalorder %s88, %s89
      %p98 = scmp.eq.s32.totalorder %s22, 0
      %p99 = por %p97, %p98
      %p100 = scmp.ne.s32.totalorder %s88, %s89
      %p101 = scmp.eq.s32.totalorder %s23, 1
      %p102 = por %p100, %p101
      %p104 = scmp.ne.s32.totalorder %s89, %s103
      %p105 = scmp.eq.s32.totalorder %s23, 0
      %p106 = por %p104, %p105
      %s108 = sadd.s32 %s107, 1
      %p111 = scmp.eq.s32.totalorder %s17, 1
      %p112 = scmp.ne.s32.totalorder %s107, %s109
      %p113 = scmp.eq.s32.totalorder %s17, 0
      %p114 = por %p112, %p113
      %p115 = scmp.ne.s32.totalorder %s107, %s109
      %p116 = scmp.eq.s32.totalorder %s22, 1
      %p117 = por %p115, %p116
      %p118 = scmp.ne.s32.totalorder %s109, %s110
      %p119 = scmp.eq.s32.totalorder %s22, 0
      %p120 = por %p118, %p119
      %p121 = scmp.ne.s32.totalorder %s109, %s110
      %p122 = scmp.eq.s32.totalorder %s23, 1
      %p123 = por %p121, %p122
      %p125 = scmp.ne.s32.totalorder %s110, %s124
      %p126 = scmp.eq.s32.totalorder %s23, 0
      %p127 = por %p125, %p126
      %s128 = ssub.s32 %s25, %s32
      %s129 = ssub.s32 %s24, %s36
      %s130 = sor.u32 %s128, %s129
      %p131 = scmp.eq.s32.totalorder %s130, 0
      %s133 = sadd.s32 %s132, 1
      %s134 = scalar_select %p131, %s132, %s133
      %p137 = pneg %p131
      %p138 = scmp.eq.s32.totalorder %s17, 1
      %p139 = por %p137, %p138
      %p140 = scmp.ne.s32.totalorder %s132, %s135
      %p141 = scmp.eq.s32.totalorder %s17, 0
      %p142 = por %p140, %p141
      %p143 = scmp.ne.s32.totalorder %s132, %s135
      %p144 = scmp.eq.s32.totalorder %s22, 1
      %p145 = por %p143, %p144
      %p146 = scmp.ne.s32.totalorder %s135, %s136
      %p147 = scmp.eq.s32.totalorder %s22, 0
      %p148 = por %p146, %p147
      %p149 = scmp.ne.s32.totalorder %s135, %s136
      %p150 = scmp.eq.s32.totalorder %s23, 1
      %p151 = por %p149, %p150
      %p153 = scmp.ne.s32.totalorder %s136, %s152
      %p154 = scmp.eq.s32.totalorder %s23, 0
      %p155 = por %p153, %p154
      %s156 = ssub.s32 %s24, %s36
      %p157 = scmp.eq.s32.totalorder %s156, 0
      %s159 = sadd.s32 %s158, 1
      %s160 = scalar_select %p157, %s158, %s159
      %p163 = pneg %p157
      %p164 = scmp.eq.s32.totalorder %s17, 1
      %p165 = por %p163, %p164
      %p166 = scmp.ne.s32.totalorder %s158, %s161
      %p167 = scmp.eq.s32.totalorder %s17, 0
      %p168 = por %p166, %p167
      %p169 = scmp.ne.s32.totalorder %s158, %s161
      %p170 = scmp.eq.s32.totalorder %s22, 1
      %p171 = por %p169, %p170
      %p172 = scmp.ne.s32.totalorder %s161, %s162
      %p173 = scmp.eq.s32.totalorder %s22, 0
      %p174 = por %p172, %p173
      %p175 = scmp.ne.s32.totalorder %s161, %s162
      %p176 = scmp.eq.s32.totalorder %s23, 1
      %p177 = por %p175, %p176
      %p179 = scmp.ne.s32.totalorder %s162, %s178
      %p180 = scmp.eq.s32.totalorder %s23, 0
      %p181 = por %p179, %p180
      %s182 = ssub.s32 %s24, %s36
      %p183 = scmp.eq.s32.totalorder %s182, 0
      %s185 = sadd.s32 %s184, 1
      %s186 = scalar_select %p183, %s184, %s185
      %p189 = pneg %p183
      %p190 = scmp.eq.s32.totalorder %s17, 1
      %p191 = por %p189, %p190
      %p192 = scmp.ne.s32.totalorder %s184, %s187
      %p193 = scmp.eq.s32.totalorder %s17, 0
      %p194 = por %p192, %p193
      %p195 = scmp.ne.s32.totalorder %s184, %s187
      %p196 = scmp.eq.s32.totalorder %s22, 1
      %p197 = por %p195, %p196
      %p198 = scmp.ne.s32.totalorder %s187, %s188
      %p199 = scmp.eq.s32.totalorder %s22, 0
      %p200 = por %p198, %p199
      %p201 = scmp.ne.s32.totalorder %s187, %s188
      %p202 = scmp.eq.s32.totalorder %s23, 1
      %p203 = por %p201, %p202
      %p205 = scmp.ne.s32.totalorder %s188, %s204
      %p206 = scmp.eq.s32.totalorder %s23, 0
      %p207 = por %p205, %p206
      %p208 = scmp.le.s32.totalorder 1, %s17
      %p209 = scmp.lt.s32.totalorder %s17, 3
      %p210 = pnand %p208, %p209
      %p211 = pneg %p210
      // Predicated region
      $region9: #{tpu_custom_call.1} parent=5 // pred_check
        _
      $region10: #{tpu_custom_call.1} parent=5 // pred_check_branch
        %213 = sbr.rel (%p210) target = $region12
      $region11: #{tpu_custom_call.1} parent=5 // pred_region
        %s214 = ssub.s32 %s17, 1
        // Predicated region
        $region13: #{tpu_custom_call.1} parent=11 // pred_check
          %p215 = pneg %p78
        $region14: #{tpu_custom_call.1} parent=11 // pred_check_branch
          %217 = sbr.rel (%p215) target = $region16
        $region15: #{tpu_custom_call.1} parent=11 // pred_region
          _
        $region16: #{tpu_custom_call.1} parent=11 // pred_fallthru
          _
        // Predicated region
        $region17: #{tpu_custom_call.1} parent=11 // pred_check
          %p218 = pneg %p99
        $region18: #{tpu_custom_call.1} parent=11 // pred_check_branch
          %220 = sbr.rel (%p218) target = $region20
        $region19: #{tpu_custom_call.1} parent=11 // pred_region
          _
        $region20: #{tpu_custom_call.1} parent=11 // pred_fallthru
          _
        // Predicated region
        $region21: #{tpu_custom_call.1} parent=11 // pred_check
          %p221 = pneg %p120
        $region22: #{tpu_custom_call.1} parent=11 // pred_check_branch
          %223 = sbr.rel (%p221) target = $region24
        $region23: #{tpu_custom_call.1} parent=11 // pred_region
          _
        $region24: #{tpu_custom_call.1} parent=11 // pred_fallthru
          _
      $region12: #{tpu_custom_call.1} parent=5 // pred_fallthru
        _
      %p224 = scmp.lt.s32.totalorder %s17, 2
      // Predicated region
      $region25: #{tpu_custom_call.1} parent=5 // pred_check
        %p225 = pneg %p224
      $region26: #{tpu_custom_call.1} parent=5 // pred_check_branch
        %227 = sbr.rel (%p225) target = $region28
      $region27: #{tpu_custom_call.1} parent=5 // pred_region
        // Predicated region
        $region29: #{tpu_custom_call.1} parent=27 // pred_check
          %p228 = pneg %p51
        $region30: #{tpu_custom_call.1} parent=27 // pred_check_branch
          %230 = sbr.rel (%p228) target = $region32
        $region31: #{tpu_custom_call.1} parent=27 // pred_region
          %s231 = smul.u32 8, %s25
          %s232 = smul.u32 2, %s24
          %p233 = scmp.lt.s32.totalorder %s231, 15
          %s234 = scalar_select %p233, %s231, 15
          %p235 = scmp.lt.s32.totalorder %s232, 1
          %s236 = scalar_select %p235, %s232, 1
          %s237 = smul.addr %s234, 2
          %s238 = sadd.s32 %s236, %s237
          %s239 = smul.addr %s238, 8
          %s240 = scalar_lea.vmem %s0, %s239
          %s241 = smul.u32 8, %s25
          %s242 = smul.u32 2, %s24
        $region32: #{tpu_custom_call.1} parent=27 // pred_fallthru
          _
      $region28: #{tpu_custom_call.1} parent=5 // pred_fallthru
        _
      %p243 = scmp.le.s32.totalorder 1, %s17
      %p244 = scmp.lt.s32.totalorder %s17, 3
      %p245 = pnand %p243, %p244
      %p246 = pneg %p245
      // Predicated region
      $region33: #{tpu_custom_call.1} parent=5 // pred_check
        _
      $region34: #{tpu_custom_call.1} parent=5 // pred_check_branch
        %248 = sbr.rel (%p245) target = $region36
      $region35: #{tpu_custom_call.1} parent=5 // pred_region
        %s249 = ssub.s32 %s17, 1
        %s250 = smul.u32 8, %s27
        %s251 = smul.u32 2, %s26
        %p252 = scmp.lt.s32.totalorder %s250, 15
        %s253 = scalar_select %p252, %s250, 15
        %p254 = scmp.lt.s32.totalorder %s251, 1
        %s255 = scalar_select %p254, %s251, 1
        %s256 = smul.addr %s253, 2
        %s257 = sadd.s32 %s255, %s256
        %s258 = smul.addr %s257, 8
        %s259 = scalar_lea.vmem %s0, %s258
        %p260 = pneg %p57
        %p261 = pneg %p54
        %p262 = pneg %p78
        %p263 = pneg %p75
        %p264 = pneg %p99
        %p265 = pneg %p96
        %p266 = pneg %p120
        %p267 = pneg %p117
        %p268 = pneg %p148
        %p269 = pneg %p145
        %s270 = sand.u32 %s135, 1
        %s271 = scalar_lea.sflag [#allocation6], %s270
        %s272 = sand.u32 %s135, 1
        %s273 = smul.addr %s272, 128
        %s274 = scalar_lea.vmem [#allocation5], %s273
        %p275 = pneg %p174
        %p276 = pneg %p171
        %p277 = pneg %p200
        %p278 = pneg %p197
        %s279 = smul.u32 8, %s27
        %s280 = smul.u32 2, %s26
        %p281 = scmp.lt.s32.totalorder %s279, 15
        %s282 = scalar_select %p281, %s279, 15
        %p283 = scmp.lt.s32.totalorder %s280, 1
        %s284 = scalar_select %p283, %s280, 1
        %s285 = smul.addr %s282, 2
        %s286 = sadd.s32 %s284, %s285
        %s287 = smul.addr %s286, 8
        %s288 = scalar_lea.vmem %s0, %s287
        %s289 = smul.u32 8, %s27
        %s290 = smul.u32 2, %s26
        %s291 = smul.u32 8, %s27
        %s292 = smul.u32 2, %s26
        %s293 = smul.u32 2, %s26
        %s294 = smul.u32 2, %s26
        %p295 = scmp.eq.s32.totalorder %s27, 0
        // Predicated region
        $region37: #{tpu_custom_call.1} parent=35 // pred_check
          %p296 = pneg %p295
        $region38: #{tpu_custom_call.1} parent=35 // pred_check_branch
          %298 = sbr.rel (%p296) target = $region40
        $region39: #{tpu_custom_call.1} parent=35 // pred_region
          %vm299 = vcmask 261120
          %300 = vst.msk [vmem:[#allocation2] sm:$0xff] %vm299, 0.0
          %301 = vst.msk [vmem:[#allocation2 + $0x8] sm:$0xff] %vm299, 0.0
          %302 = vst.msk [vmem:[#allocation3] sm:$0xff] %vm299, 0.0
          %303 = vst.msk [vmem:[#allocation3 + $0x8] sm:$0xff] %vm299, 0.0
        $region40: #{tpu_custom_call.1} parent=35 // pred_fallthru
          _
        %v304 = vld [vmem:[%s288] sm:$0xff]
        %v305 = vld [vmem:[%s288 + $0x8] sm:$0xff]
        %v306 = vld [vmem:[%s288 + $0x10] sm:$0xff]
        %v307 = vld [vmem:[%s288 + $0x18] sm:$0xff]
        %v308 = vld [vmem:[%s288 + $0x20] sm:$0xff]
        %v309 = vld [vmem:[%s288 + $0x28] sm:$0xff]
        %v310 = vld [vmem:[%s288 + $0x30] sm:$0xff]
        %v311 = vld [vmem:[%s288 + $0x38] sm:$0xff]
        %v312 = vld [vmem:[%s288 + $0x40] sm:$0xff]
        %v313 = vld [vmem:[%s288 + $0x48] sm:$0xff]
        %v314 = vld [vmem:[%s288 + $0x50] sm:$0xff]
        %v315 = vld [vmem:[%s288 + $0x58] sm:$0xff]
        %v316 = vld [vmem:[%s288 + $0x60] sm:$0xff]
        %v317 = vld [vmem:[%s288 + $0x68] sm:$0xff]
        %v318 = vld [vmem:[%s288 + $0x70] sm:$0xff]
        %v319 = vld [vmem:[%s288 + $0x78] sm:$0xff]
        %v320 = vld [vmem:[%s1] sm:$0xf]
        %v321 = vld [vmem:[%s3] sm:$0x1]
        %v323 = vperm.slane %v321, 0
        %vm325 = vcmask 31744
        %v327 = vsel %vm325, %v304, 0
        %v330 = vsel %vm325, %v305, 0
        %v333 = vsel %vm325, %v306, 0
        %v336 = vsel %vm325, %v307, 0
        %v339 = vsel %vm325, %v308, 0
        %v342 = vsel %vm325, %v309, 0
        %v345 = vsel %vm325, %v310, 0
        %v348 = vsel %vm325, %v311, 0
        %v351 = vsel %vm325, %v312, 0
        %v354 = vsel %vm325, %v313, 0
        %v357 = vsel %vm325, %v314, 0
        %v360 = vsel %vm325, %v315, 0
        %v363 = vsel %vm325, %v316, 0
        %v366 = vsel %vm325, %v317, 0
        %v369 = vsel %vm325, %v318, 0
        %v372 = vsel %vm325, %v319, 0
        %vm374 = vcmask 1043456
        %v376 = vsel %vm374, %v320, 0
        %378 = vmatpush.msra.mxu0 0.0
        %379 = vmatpush.msra.mxu0 0.0
        %380 = vmatpush.msra.mxu0 0.0
        %381 = vmatpush.msra.mxu0 0.0
        %382 = vmatpush.msra.mxu0 0.0
        %383 = vmatpush.msra.mxu0 0.0
        %384 = vmatpush.msra.mxu0 0.0
        %385 = vmatpush.msra.mxu0 0.0
        %386 = vmatpush.msra.mxu0 0.0
        %387 = vmatpush.msra.mxu0 0.0
        %388 = vmatpush.msra.mxu0 0.0
        %389 = vmatpush.msra.mxu0 0.0
        %390 = vmatpush.msra.mxu0 0.0
        %391 = vmatpush.msra.mxu0 0.0
        %392 = vmatpush.msra.mxu0 0.0
        %393 = vmatpush.msra.mxu0 %v376
        %394 = vmatmul.f32.gmra.mxu0 %v327
        %v395 = vpop.f32.mrf.mxu0
        %v396 = vadd.f32 %v323, %v395
        %397 = vmatmul.f32.gmra.mxu0 %v330
        %v398 = vpop.f32.mrf.mxu0
        %v399 = vadd.f32 %v323, %v398
        %400 = vmatmul.f32.gmra.mxu0 %v333
        %v401 = vpop.f32.mrf.mxu0
        %v402 = vadd.f32 %v323, %v401
        %403 = vmatmul.f32.gmra.mxu0 %v336
        %v404 = vpop.f32.mrf.mxu0
        %v405 = vadd.f32 %v323, %v404
        %406 = vmatmul.f32.gmra.mxu0 %v339
        %v407 = vpop.f32.mrf.mxu0
        %v408 = vadd.f32 %v323, %v407
        %409 = vmatmul.f32.gmra.mxu0 %v342
        %v410 = vpop.f32.mrf.mxu0
        %v411 = vadd.f32 %v323, %v410
        %412 = vmatmul.f32.gmra.mxu0 %v345
        %v413 = vpop.f32.mrf.mxu0
        %v414 = vadd.f32 %v323, %v413
        %415 = vmatmul.f32.gmra.mxu0 %v348
        %v416 = vpop.f32.mrf.mxu0
        %v417 = vadd.f32 %v323, %v416
        %418 = vmatmul.f32.gmra.mxu0 %v351
        %v419 = vpop.f32.mrf.mxu0
        %v420 = vadd.f32 %v323, %v419
        %421 = vmatmul.f32.gmra.mxu0 %v354
        %v422 = vpop.f32.mrf.mxu0
        %v423 = vadd.f32 %v323, %v422
        %424 = vmatmul.f32.gmra.mxu0 %v357
        %v425 = vpop.f32.mrf.mxu0
        %v426 = vadd.f32 %v323, %v425
        %427 = vmatmul.f32.gmra.mxu0 %v360
        %v428 = vpop.f32.mrf.mxu0
        %v429 = vadd.f32 %v323, %v428
        %430 = vmatmul.f32.gmra.mxu0 %v363
        %v431 = vpop.f32.mrf.mxu0
        %v432 = vadd.f32 %v323, %v431
        %433 = vmatmul.f32.gmra.mxu0 %v366
        %v434 = vpop.f32.mrf.mxu0
        %v435 = vadd.f32 %v323, %v434
        %436 = vmatmul.f32.gmra.mxu0 %v369
        %v437 = vpop.f32.mrf.mxu0
        %v438 = vadd.f32 %v323, %v437
        %439 = vmatmul.f32.gmra.mxu0 %v372
        %v440 = vpop.f32.mrf.mxu0
        %v441 = vadd.f32 %v323, %v440
        %442 = vdwg.mxu0
        %443 = vst [vmem:[#allocation4] sm:$0xff] %v396
        %444 = vst [vmem:[#allocation4 + $0x8] sm:$0xff] %v399
        %445 = vst [vmem:[#allocation4 + $0x10] sm:$0xff] %v402
        %446 = vst [vmem:[#allocation4 + $0x18] sm:$0xff] %v405
        %447 = vst [vmem:[#allocation4 + $0x20] sm:$0xff] %v408
        %448 = vst [vmem:[#allocation4 + $0x28] sm:$0xff] %v411
        %449 = vst [vmem:[#allocation4 + $0x30] sm:$0xff] %v414
        %450 = vst [vmem:[#allocation4 + $0x38] sm:$0xff] %v417
        %451 = vst [vmem:[#allocation4 + $0x40] sm:$0xff] %v420
        %452 = vst [vmem:[#allocation4 + $0x48] sm:$0xff] %v423
        %453 = vst [vmem:[#allocation4 + $0x50] sm:$0xff] %v426
        %454 = vst [vmem:[#allocation4 + $0x58] sm:$0xff] %v429
        %455 = vst [vmem:[#allocation4 + $0x60] sm:$0xff] %v432
        %456 = vst [vmem:[#allocation4 + $0x68] sm:$0xff] %v435
        %457 = vst [vmem:[#allocation4 + $0x70] sm:$0xff] %v438
        %458 = vst [vmem:[#allocation4 + $0x78] sm:$0xff] %v441
        %v459 = vld [vmem:[%s2] sm:$0xff]
        %v460 = vld [vmem:[%s2 + $0x8] sm:$0xff]
        %v461 = vld [vmem:[%s2 + $0x10] sm:$0xff]
        %v462 = vld [vmem:[%s2 + $0x18] sm:$0xff]
        %v463 = vld [vmem:[#allocation2] sm:$0xff]
        %v464 = vld [vmem:[#allocation2 + $0x8] sm:$0xff]
        %v465 = vld [vmem:[#allocation3] sm:$0xff]
        %v466 = vld [vmem:[#allocation3 + $0x8] sm:$0xff]
        %v467 = vld [vmem:[#allocation4] sm:$0xff]
        %v468 = vld [vmem:[#allocation4 + $0x8] sm:$0xff]
        %vm469 = vcmask 261120
        %v471 = vsel %vm469, %v463, 0
        %v474 = vsel %vm469, %v464, 0
        %476 = vmatpush.msra.mxu0 0.0
        %477 = vmatpush.msra.mxu0 0.0
        %478 = vmatpush.msra.mxu0 0.0
        %479 = vmatpush.msra.mxu0 0.0
        %480 = vmatpush.msra.mxu0 0.0
        %481 = vmatpush.msra.mxu0 0.0
        %482 = vmatpush.msra.mxu0 0.0
        %483 = vmatpush.msra.mxu0 0.0
        %484 = vmatpush.msra.mxu0 0.0
        %485 = vmatpush.msra.mxu0 0.0
        %486 = vmatpush.msra.mxu0 0.0
        %487 = vmatpush.msra.mxu0 0.0
        %488 = vmatpush.msra.mxu0 %v462
        %489 = vmatpush.msra.mxu0 %v461
        %490 = vmatpush.msra.mxu0 %v460
        %491 = vmatpush.msra.mxu0 %v459
        %492 = vmatmul.f32.gmra.mxu0 %v471
        %v493 = vpop.f32.mrf.mxu0
        %v494 = vadd.f32 0.0, %v493
        %495 = vmatmul.f32.gmra.mxu0 %v474
        %v496 = vpop.f32.mrf.mxu0
        %v497 = vadd.f32 0.0, %v496
        %498 = vdwg.mxu0
        %v499 = vadd.f32 %v467, %v494
        %v500 = vadd.f32 %v468, %v497
        %v501 = vmul.f32 %v499, 0.5
        %v502 = vmul.f32 %v500, 0.5
        %v503 = vtanh.pop %v501
        %v504 = vtanh.pop %v502
        %v505 = vadd.f32 %v503, 1.0
        %v506 = vadd.f32 %v504, 1.0
        %v507 = vmul.f32 %v505, 0.5
        %v508 = vmul.f32 %v506, 0.5
        %v509 = vtanh.pop %v499
        %v510 = vtanh.pop %v500
        %513 = vrot.lane.b32.xlu0 %v465, 32
        %v514 = vpop.permute.xlu0 %513
        %515 = vrot.lane.b32.xlu0 %v466, 32
        %v516 = vpop.permute.xlu0 %515
        %v519 = vmul.f32 %v507, %v514
        %v520 = vmul.f32 %v508, %v516
        %523 = vrot.lane.b32.xlu0 %v509, 32
        %v524 = vpop.permute.xlu0 %523
        %525 = vrot.lane.b32.xlu0 %v510, 32
        %v526 = vpop.permute.xlu0 %525
        %v529 = vmul.f32 %v507, %v524
        %v530 = vmul.f32 %v508, %v526
        %533 = vrot.lane.b32.xlu0 %v529, 32
        %v534 = vpop.permute.xlu0 %533
        %535 = vrot.lane.b32.xlu0 %v530, 32
        %v536 = vpop.permute.xlu0 %535
        %v539 = vadd.f32 %v519, %v534
        %v540 = vadd.f32 %v520, %v536
        %v541 = vtanh.pop %v539
        %v542 = vtanh.pop %v540
        %545 = vrot.lane.b32.xlu0 %v541, 32
        %v546 = vpop.permute.xlu0 %545
        %547 = vrot.lane.b32.xlu0 %v542, 32
        %v548 = vpop.permute.xlu0 %547
        %v551 = vmul.f32 %v507, %v546
        %v552 = vmul.f32 %v508, %v548
        %555 = vrot.lane.b32.xlu0 %v551, 64
        %v556 = vpop.permute.xlu0 %555
        %557 = vrot.lane.b32.xlu0 %v552, 64
        %v558 = vpop.permute.xlu0 %557
        %561 = vst.msk [vmem:[%s274] sm:$0xff] %vm469, %v556
        %562 = vst.msk [vmem:[%s274 + $0x8] sm:$0xff] %vm469, %v558
        %s563 = scalar_lea.vmem [#allocation4], 16
        %v564 = vld [vmem:[%s563] sm:$0xff]
        %v565 = vld [vmem:[%s563 + $0x8] sm:$0xff]
        %v566 = vsel %vm469, %v556, 0
        %v568 = vsel %vm469, %v558, 0
        %570 = vmatpush.msra.mxu0 0.0
        %571 = vmatpush.msra.mxu0 0.0
        %572 = vmatpush.msra.mxu0 0.0
        %573 = vmatpush.msra.mxu0 0.0
        %574 = vmatpush.msra.mxu0 0.0
        %575 = vmatpush.msra.mxu0 0.0
        %576 = vmatpush.msra.mxu0 0.0
        %577 = vmatpush.msra.mxu0 0.0
        %578 = vmatpush.msra.mxu0 0.0
        %579 = vmatpush.msra.mxu0 0.0
        %580 = vmatpush.msra.mxu0 0.0
        %581 = vmatpush.msra.mxu0 0.0
        %582 = vmatpush.msra.mxu0 %v462
        %583 = vmatpush.msra.mxu0 %v461
        %584 = vmatpush.msra.mxu0 %v460
        %585 = vmatpush.msra.mxu0 %v459
        %586 = vmatmul.f32.gmra.mxu0 %v566
        %v587 = vpop.f32.mrf.mxu0
        %v588 = vadd.f32 0.0, %v587
        %589 = vmatmul.f32.gmra.mxu0 %v568
        %v590 = vpop.f32.mrf.mxu0
        %v591 = vadd.f32 0.0, %v590
        %592 = vdwg.mxu0
        %v593 = vadd.f32 %v564, %v588
        %v594 = vadd.f32 %v565, %v591
        %v595 = vmul.f32 %v593, 0.5
        %v596 = vmul.f32 %v594, 0.5
        %v597 = vtanh.pop %v595
        %v598 = vtanh.pop %v596
        %v599 = vadd.f32 %v597, 1.0
        %v600 = vadd.f32 %v598, 1.0
        %v601 = vmul.f32 %v599, 0.5
        %v602 = vmul.f32 %v600, 0.5
        %v603 = vtanh.pop %v593
        %v604 = vtanh.pop %v594
        %v605 = vmul.f32 %v601, %v539
        %v606 = vmul.f32 %v602, %v540
        %609 = vrot.lane.b32.xlu0 %v603, 32
        %v610 = vpop.permute.xlu0 %609
        %611 = vrot.lane.b32.xlu0 %v604, 32
        %v612 = vpop.permute.xlu0 %611
        %v615 = vmul.f32 %v601, %v610
        %v616 = vmul.f32 %v602, %v612
        %619 = vrot.lane.b32.xlu0 %v615, 32
        %v620 = vpop.permute.xlu0 %619
        %621 = vrot.lane.b32.xlu0 %v616, 32
        %v622 = vpop.permute.xlu0 %621
        %v625 = vadd.f32 %v605, %v620
        %v626 = vadd.f32 %v606, %v622
        %v627 = vtanh.pop %v625
        %v628 = vtanh.pop %v626
        %631 = vrot.lane.b32.xlu0 %v627, 32
        %v632 = vpop.permute.xlu0 %631
        %633 = vrot.lane.b32.xlu0 %v628, 32
        %v634 = vpop.permute.xlu0 %633
        %v637 = vmul.f32 %v601, %v632
        %v638 = vmul.f32 %v602, %v634
        %641 = vrot.lane.b32.xlu0 %v637, 64
        %v642 = vpop.permute.xlu0 %641
        %643 = vrot.lane.b32.xlu0 %v638, 64
        %v644 = vpop.permute.xlu0 %643
        %s647 = scalar_lea.vmem %s274, 16 [#allocation5]
        %648 = vst.msk [vmem:[%s647] sm:$0xff] %vm469, %v642
        %649 = vst.msk [vmem:[%s647 + $0x8] sm:$0xff] %vm469, %v644
        %s650 = scalar_lea.vmem [#allocation4], 32
        %v651 = vld [vmem:[%s650] sm:$0xff]
        %v652 = vld [vmem:[%s650 + $0x8] sm:$0xff]
        %v653 = vsel %vm469, %v642, 0
        %v655 = vsel %vm469, %v644, 0
        %657 = vmatpush.msra.mxu0 0.0
        %658 = vmatpush.msra.mxu0 0.0
        %659 = vmatpush.msra.mxu0 0.0
        %660 = vmatpush.msra.mxu0 0.0
        %661 = vmatpush.msra.mxu0 0.0
        %662 = vmatpush.msra.mxu0 0.0
        %663 = vmatpush.msra.mxu0 0.0
        %664 = vmatpush.msra.mxu0 0.0
        %665 = vmatpush.msra.mxu0 0.0
        %666 = vmatpush.msra.mxu0 0.0
        %667 = vmatpush.msra.mxu0 0.0
        %668 = vmatpush.msra.mxu0 0.0
        %669 = vmatpush.msra.mxu0 %v462
        %670 = vmatpush.msra.mxu0 %v461
        %671 = vmatpush.msra.mxu0 %v460
        %672 = vmatpush.msra.mxu0 %v459
        %673 = vmatmul.f32.gmra.mxu0 %v653
        %v674 = vpop.f32.mrf.mxu0
        %v675 = vadd.f32 0.0, %v674
        %676 = vmatmul.f32.gmra.mxu0 %v655
        %v677 = vpop.f32.mrf.mxu0
        %v678 = vadd.f32 0.0, %v677
        %679 = vdwg.mxu0
        %v680 = vadd.f32 %v651, %v675
        %v681 = vadd.f32 %v652, %v678
        %v682 = vmul.f32 %v680, 0.5
        %v683 = vmul.f32 %v681, 0.5
        %v684 = vtanh.pop %v682
        %v685 = vtanh.pop %v683
        %v686 = vadd.f32 %v684, 1.0
        %v687 = vadd.f32 %v685, 1.0
        %v688 = vmul.f32 %v686, 0.5
        %v689 = vmul.f32 %v687, 0.5
        %v690 = vtanh.pop %v680
        %v691 = vtanh.pop %v681
        %v692 = vmul.f32 %v688, %v625
        %v693 = vmul.f32 %v689, %v626
        %696 = vrot.lane.b32.xlu0 %v690, 32
        %v697 = vpop.permute.xlu0 %696
        %698 = vrot.lane.b32.xlu0 %v691, 32
        %v699 = vpop.permute.xlu0 %698
        %v702 = vmul.f32 %v688, %v697
        %v703 = vmul.f32 %v689, %v699
        %706 = vrot.lane.b32.xlu0 %v702, 32
        %v707 = vpop.permute.xlu0 %706
        %708 = vrot.lane.b32.xlu0 %v703, 32
        %v709 = vpop.permute.xlu0 %708
        %v712 = vadd.f32 %v692, %v707
        %v713 = vadd.f32 %v693, %v709
        %v714 = vtanh.pop %v712
        %v715 = vtanh.pop %v713
        %718 = vrot.lane.b32.xlu0 %v714, 32
        %v719 = vpop.permute.xlu0 %718
        %720 = vrot.lane.b32.xlu0 %v715, 32
        %v721 = vpop.permute.xlu0 %720
        %v724 = vmul.f32 %v688, %v719
        %v725 = vmul.f32 %v689, %v721
        %728 = vrot.lane.b32.xlu0 %v724, 64
        %v729 = vpop.permute.xlu0 %728
        %730 = vrot.lane.b32.xlu0 %v725, 64
        %v731 = vpop.permute.xlu0 %730
        %s734 = scalar_lea.vmem %s274, 32 [#allocation5]
        %735 = vst.msk [vmem:[%s734] sm:$0xff] %vm469, %v729
        %736 = vst.msk [vmem:[%s734 + $0x8] sm:$0xff] %vm469, %v731
        %s737 = scalar_lea.vmem [#allocation4], 48
        %v738 = vld [vmem:[%s737] sm:$0xff]
        %v739 = vld [vmem:[%s737 + $0x8] sm:$0xff]
        %v740 = vsel %vm469, %v729, 0
        %v742 = vsel %vm469, %v731, 0
        %744 = vmatpush.msra.mxu0 0.0
        %745 = vmatpush.msra.mxu0 0.0
        %746 = vmatpush.msra.mxu0 0.0
        %747 = vmatpush.msra.mxu0 0.0
        %748 = vmatpush.msra.mxu0 0.0
        %749 = vmatpush.msra.mxu0 0.0
        %750 = vmatpush.msra.mxu0 0.0
        %751 = vmatpush.msra.mxu0 0.0
        %752 = vmatpush.msra.mxu0 0.0
        %753 = vmatpush.msra.mxu0 0.0
        %754 = vmatpush.msra.mxu0 0.0
        %755 = vmatpush.msra.mxu0 0.0
        %756 = vmatpush.msra.mxu0 %v462
        %757 = vmatpush.msra.mxu0 %v461
        %758 = vmatpush.msra.mxu0 %v460
        %759 = vmatpush.msra.mxu0 %v459
        %760 = vmatmul.f32.gmra.mxu0 %v740
        %v761 = vpop.f32.mrf.mxu0
        %v762 = vadd.f32 0.0, %v761
        %763 = vmatmul.f32.gmra.mxu0 %v742
        %v764 = vpop.f32.mrf.mxu0
        %v765 = vadd.f32 0.0, %v764
        %766 = vdwg.mxu0
        %v767 = vadd.f32 %v738, %v762
        %v768 = vadd.f32 %v739, %v765
        %v769 = vmul.f32 %v767, 0.5
        %v770 = vmul.f32 %v768, 0.5
        %v771 = vtanh.pop %v769
        %v772 = vtanh.pop %v770
        %v773 = vadd.f32 %v771, 1.0
        %v774 = vadd.f32 %v772, 1.0
        %v775 = vmul.f32 %v773, 0.5
        %v776 = vmul.f32 %v774, 0.5
        %v777 = vtanh.pop %v767
        %v778 = vtanh.pop %v768
        %v779 = vmul.f32 %v775, %v712
        %v780 = vmul.f32 %v776, %v713
        %783 = vrot.lane.b32.xlu0 %v777, 32
        %v784 = vpop.permute.xlu0 %783
        %785 = vrot.lane.b32.xlu0 %v778, 32
        %v786 = vpop.permute.xlu0 %785
        %v789 = vmul.f32 %v775, %v784
        %v790 = vmul.f32 %v776, %v786
        %793 = vrot.lane.b32.xlu0 %v789, 32
        %v794 = vpop.permute.xlu0 %793
        %795 = vrot.lane.b32.xlu0 %v790, 32
        %v796 = vpop.permute.xlu0 %795
        %v799 = vadd.f32 %v779, %v794
        %v800 = vadd.f32 %v780, %v796
        %v801 = vtanh.pop %v799
        %v802 = vtanh.pop %v800
        %805 = vrot.lane.b32.xlu0 %v801, 32
        %v806 = vpop.permute.xlu0 %805
        %807 = vrot.lane.b32.xlu0 %v802, 32
        %v808 = vpop.permute.xlu0 %807
        %v811 = vmul.f32 %v775, %v806
        %v812 = vmul.f32 %v776, %v808
        %815 = vrot.lane.b32.xlu0 %v811, 64
        %v816 = vpop.permute.xlu0 %815
        %817 = vrot.lane.b32.xlu0 %v812, 64
        %v818 = vpop.permute.xlu0 %817
        %s821 = scalar_lea.vmem %s274, 48 [#allocation5]
        %822 = vst.msk [vmem:[%s821] sm:$0xff] %vm469, %v816
        %823 = vst.msk [vmem:[%s821 + $0x8] sm:$0xff] %vm469, %v818
        %s824 = scalar_lea.vmem [#allocation4], 64
        %v825 = vld [vmem:[%s824] sm:$0xff]
        %v826 = vld [vmem:[%s824 + $0x8] sm:$0xff]
        %v827 = vsel %vm469, %v816, 0
        %v829 = vsel %vm469, %v818, 0
        %831 = vmatpush.msra.mxu0 0.0
        %832 = vmatpush.msra.mxu0 0.0
        %833 = vmatpush.msra.mxu0 0.0
        %834 = vmatpush.msra.mxu0 0.0
        %835 = vmatpush.msra.mxu0 0.0
        %836 = vmatpush.msra.mxu0 0.0
        %837 = vmatpush.msra.mxu0 0.0
        %838 = vmatpush.msra.mxu0 0.0
        %839 = vmatpush.msra.mxu0 0.0
        %840 = vmatpush.msra.mxu0 0.0
        %841 = vmatpush.msra.mxu0 0.0
        %842 = vmatpush.msra.mxu0 0.0
        %843 = vmatpush.msra.mxu0 %v462
        %844 = vmatpush.msra.mxu0 %v461
        %845 = vmatpush.msra.mxu0 %v460
        %846 = vmatpush.msra.mxu0 %v459
        %847 = vmatmul.f32.gmra.mxu0 %v827
        %v848 = vpop.f32.mrf.mxu0
        %v849 = vadd.f32 0.0, %v848
        %850 = vmatmul.f32.gmra.mxu0 %v829
        %v851 = vpop.f32.mrf.mxu0
        %v852 = vadd.f32 0.0, %v851
        %853 = vdwg.mxu0
        %v854 = vadd.f32 %v825, %v849
        %v855 = vadd.f32 %v826, %v852
        %v856 = vmul.f32 %v854, 0.5
        %v857 = vmul.f32 %v855, 0.5
        %v858 = vtanh.pop %v856
        %v859 = vtanh.pop %v857
        %v860 = vadd.f32 %v858, 1.0
        %v861 = vadd.f32 %v859, 1.0
        %v862 = vmul.f32 %v860, 0.5
        %v863 = vmul.f32 %v861, 0.5
        %v864 = vtanh.pop %v854
        %v865 = vtanh.pop %v855
        %v866 = vmul.f32 %v862, %v799
        %v867 = vmul.f32 %v863, %v800
        %870 = vrot.lane.b32.xlu0 %v864, 32
        %v871 = vpop.permute.xlu0 %870
        %872 = vrot.lane.b32.xlu0 %v865, 32
        %v873 = vpop.permute.xlu0 %872
        %v876 = vmul.f32 %v862, %v871
        %v877 = vmul.f32 %v863, %v873
        %880 = vrot.lane.b32.xlu0 %v876, 32
        %v881 = vpop.permute.xlu0 %880
        %882 = vrot.lane.b32.xlu0 %v877, 32
        %v883 = vpop.permute.xlu0 %882
        %v886 = vadd.f32 %v866, %v881
        %v887 = vadd.f32 %v867, %v883
        %v888 = vtanh.pop %v886
        %v889 = vtanh.pop %v887
        %892 = vrot.lane.b32.xlu0 %v888, 32
        %v893 = vpop.permute.xlu0 %892
        %894 = vrot.lane.b32.xlu0 %v889, 32
        %v895 = vpop.permute.xlu0 %894
        %v898 = vmul.f32 %v862, %v893
        %v899 = vmul.f32 %v863, %v895
        %902 = vrot.lane.b32.xlu0 %v898, 64
        %v903 = vpop.permute.xlu0 %902
        %904 = vrot.lane.b32.xlu0 %v899, 64
        %v905 = vpop.permute.xlu0 %904
        %s908 = scalar_lea.vmem %s274, 64 [#allocation5]
        %909 = vst.msk [vmem:[%s908] sm:$0xff] %vm469, %v903
        %910 = vst.msk [vmem:[%s908 + $0x8] sm:$0xff] %vm469, %v905
        %s911 = scalar_lea.vmem [#allocation4], 80
        %v912 = vld [vmem:[%s911] sm:$0xff]
        %v913 = vld [vmem:[%s911 + $0x8] sm:$0xff]
        %v914 = vsel %vm469, %v903, 0
        %v916 = vsel %vm469, %v905, 0
        %918 = vmatpush.msra.mxu0 0.0
        %919 = vmatpush.msra.mxu0 0.0
        %920 = vmatpush.msra.mxu0 0.0
        %921 = vmatpush.msra.mxu0 0.0
        %922 = vmatpush.msra.mxu0 0.0
        %923 = vmatpush.msra.mxu0 0.0
        %924 = vmatpush.msra.mxu0 0.0
        %925 = vmatpush.msra.mxu0 0.0
        %926 = vmatpush.msra.mxu0 0.0
        %927 = vmatpush.msra.mxu0 0.0
        %928 = vmatpush.msra.mxu0 0.0
        %929 = vmatpush.msra.mxu0 0.0
        %930 = vmatpush.msra.mxu0 %v462
        %931 = vmatpush.msra.mxu0 %v461
        %932 = vmatpush.msra.mxu0 %v460
        %933 = vmatpush.msra.mxu0 %v459
        %934 = vmatmul.f32.gmra.mxu0 %v914
        %v935 = vpop.f32.mrf.mxu0
        %v936 = vadd.f32 0.0, %v935
        %937 = vmatmul.f32.gmra.mxu0 %v916
        %v938 = vpop.f32.mrf.mxu0
        %v939 = vadd.f32 0.0, %v938
        %940 = vdwg.mxu0
        %v941 = vadd.f32 %v912, %v936
        %v942 = vadd.f32 %v913, %v939
        %v943 = vmul.f32 %v941, 0.5
        %v944 = vmul.f32 %v942, 0.5
        %v945 = vtanh.pop %v943
        %v946 = vtanh.pop %v944
        %v947 = vadd.f32 %v945, 1.0
        %v948 = vadd.f32 %v946, 1.0
        %v949 = vmul.f32 %v947, 0.5
        %v950 = vmul.f32 %v948, 0.5
        %v951 = vtanh.pop %v941
        %v952 = vtanh.pop %v942
        %v953 = vmul.f32 %v949, %v886
        %v954 = vmul.f32 %v950, %v887
        %957 = vrot.lane.b32.xlu0 %v951, 32
        %v958 = vpop.permute.xlu0 %957
        %959 = vrot.lane.b32.xlu0 %v952, 32
        %v960 = vpop.permute.xlu0 %959
        %v963 = vmul.f32 %v949, %v958
        %v964 = vmul.f32 %v950, %v960
        %967 = vrot.lane.b32.xlu0 %v963, 32
        %v968 = vpop.permute.xlu0 %967
        %969 = vrot.lane.b32.xlu0 %v964, 32
        %v970 = vpop.permute.xlu0 %969
        %v973 = vadd.f32 %v953, %v968
        %v974 = vadd.f32 %v954, %v970
        %v975 = vtanh.pop %v973
        %v976 = vtanh.pop %v974
        %979 = vrot.lane.b32.xlu0 %v975, 32
        %v980 = vpop.permute.xlu0 %979
        %981 = vrot.lane.b32.xlu0 %v976, 32
        %v982 = vpop.permute.xlu0 %981
        %v985 = vmul.f32 %v949, %v980
        %v986 = vmul.f32 %v950, %v982
        %989 = vrot.lane.b32.xlu0 %v985, 64
        %v990 = vpop.permute.xlu0 %989
        %991 = vrot.lane.b32.xlu0 %v986, 64
        %v992 = vpop.permute.xlu0 %991
        %s995 = scalar_lea.vmem %s274, 80 [#allocation5]
        %996 = vst.msk [vmem:[%s995] sm:$0xff] %vm469, %v990
        %997 = vst.msk [vmem:[%s995 + $0x8] sm:$0xff] %vm469, %v992
        %s998 = scalar_lea.vmem [#allocation4], 96
        %v999 = vld [vmem:[%s998] sm:$0xff]
        %v1000 = vld [vmem:[%s998 + $0x8] sm:$0xff]
        %v1001 = vsel %vm469, %v990, 0
        %v1003 = vsel %vm469, %v992, 0
        %1005 = vmatpush.msra.mxu0 0.0
        %1006 = vmatpush.msra.mxu0 0.0
        %1007 = vmatpush.msra.mxu0 0.0
        %1008 = vmatpush.msra.mxu0 0.0
        %1009 = vmatpush.msra.mxu0 0.0
        %1010 = vmatpush.msra.mxu0 0.0
        %1011 = vmatpush.msra.mxu0 0.0
        %1012 = vmatpush.msra.mxu0 0.0
        %1013 = vmatpush.msra.mxu0 0.0
        %1014 = vmatpush.msra.mxu0 0.0
        %1015 = vmatpush.msra.mxu0 0.0
        %1016 = vmatpush.msra.mxu0 0.0
        %1017 = vmatpush.msra.mxu0 %v462
        %1018 = vmatpush.msra.mxu0 %v461
        %1019 = vmatpush.msra.mxu0 %v460
        %1020 = vmatpush.msra.mxu0 %v459
        %1021 = vmatmul.f32.gmra.mxu0 %v1001
        %v1022 = vpop.f32.mrf.mxu0
        %v1023 = vadd.f32 0.0, %v1022
        %1024 = vmatmul.f32.gmra.mxu0 %v1003
        %v1025 = vpop.f32.mrf.mxu0
        %v1026 = vadd.f32 0.0, %v1025
        %1027 = vdwg.mxu0
        %v1028 = vadd.f32 %v999, %v1023
        %v1029 = vadd.f32 %v1000, %v1026
        %v1030 = vmul.f32 %v1028, 0.5
        %v1031 = vmul.f32 %v1029, 0.5
        %v1032 = vtanh.pop %v1030
        %v1033 = vtanh.pop %v1031
        %v1034 = vadd.f32 %v1032, 1.0
        %v1035 = vadd.f32 %v1033, 1.0
        %v1036 = vmul.f32 %v1034, 0.5
        %v1037 = vmul.f32 %v1035, 0.5
        %v1038 = vtanh.pop %v1028
        %v1039 = vtanh.pop %v1029
        %v1040 = vmul.f32 %v1036, %v973
        %v1041 = vmul.f32 %v1037, %v974
        %1044 = vrot.lane.b32.xlu0 %v1038, 32
        %v1045 = vpop.permute.xlu0 %1044
        %1046 = vrot.lane.b32.xlu0 %v1039, 32
        %v1047 = vpop.permute.xlu0 %1046
        %v1050 = vmul.f32 %v1036, %v1045
        %v1051 = vmul.f32 %v1037, %v1047
        %1054 = vrot.lane.b32.xlu0 %v1050, 32
        %v1055 = vpop.permute.xlu0 %1054
        %1056 = vrot.lane.b32.xlu0 %v1051, 32
        %v1057 = vpop.permute.xlu0 %1056
        %v1060 = vadd.f32 %v1040, %v1055
        %v1061 = vadd.f32 %v1041, %v1057
        %v1062 = vtanh.pop %v1060
        %v1063 = vtanh.pop %v1061
        %1066 = vrot.lane.b32.xlu0 %v1062, 32
        %v1067 = vpop.permute.xlu0 %1066
        %1068 = vrot.lane.b32.xlu0 %v1063, 32
        %v1069 = vpop.permute.xlu0 %1068
        %v1072 = vmul.f32 %v1036, %v1067
        %v1073 = vmul.f32 %v1037, %v1069
        %1076 = vrot.lane.b32.xlu0 %v1072, 64
        %v1077 = vpop.permute.xlu0 %1076
        %1078 = vrot.lane.b32.xlu0 %v1073, 64
        %v1079 = vpop.permute.xlu0 %1078
        %s1082 = scalar_lea.vmem %s274, 96 [#allocation5]
        %1083 = vst.msk [vmem:[%s1082] sm:$0xff] %vm469, %v1077
        %1084 = vst.msk [vmem:[%s1082 + $0x8] sm:$0xff] %vm469, %v1079
        %s1085 = scalar_lea.vmem [#allocation4], 112
        %v1086 = vld [vmem:[%s1085] sm:$0xff]
        %v1087 = vld [vmem:[%s1085 + $0x8] sm:$0xff]
        %v1088 = vsel %vm469, %v1077, 0
        %v1090 = vsel %vm469, %v1079, 0
        %1092 = vmatpush.msra.mxu0 0.0
        %1093 = vmatpush.msra.mxu0 0.0
        %1094 = vmatpush.msra.mxu0 0.0
        %1095 = vmatpush.msra.mxu0 0.0
        %1096 = vmatpush.msra.mxu0 0.0
        %1097 = vmatpush.msra.mxu0 0.0
        %1098 = vmatpush.msra.mxu0 0.0
        %1099 = vmatpush.msra.mxu0 0.0
        %1100 = vmatpush.msra.mxu0 0.0
        %1101 = vmatpush.msra.mxu0 0.0
        %1102 = vmatpush.msra.mxu0 0.0
        %1103 = vmatpush.msra.mxu0 0.0
        %1104 = vmatpush.msra.mxu0 %v462
        %1105 = vmatpush.msra.mxu0 %v461
        %1106 = vmatpush.msra.mxu0 %v460
        %1107 = vmatpush.msra.mxu0 %v459
        %1108 = vmatmul.f32.gmra.mxu0 %v1088
        %v1109 = vpop.f32.mrf.mxu0
        %v1110 = vadd.f32 0.0, %v1109
        %1111 = vmatmul.f32.gmra.mxu0 %v1090
        %v1112 = vpop.f32.mrf.mxu0
        %v1113 = vadd.f32 0.0, %v1112
        %1114 = vdwg.mxu0
        %v1115 = vadd.f32 %v1086, %v1110
        %v1116 = vadd.f32 %v1087, %v1113
        %v1117 = vmul.f32 %v1115, 0.5
        %v1118 = vmul.f32 %v1116, 0.5
        %v1119 = vtanh.pop %v1117
        %v1120 = vtanh.pop %v1118
        %v1121 = vadd.f32 %v1119, 1.0
        %v1122 = vadd.f32 %v1120, 1.0
        %v1123 = vmul.f32 %v1121, 0.5
        %v1124 = vmul.f32 %v1122, 0.5
        %v1125 = vtanh.pop %v1115
        %v1126 = vtanh.pop %v1116
        %v1127 = vmul.f32 %v1123, %v1060
        %v1128 = vmul.f32 %v1124, %v1061
        %1131 = vrot.lane.b32.xlu0 %v1125, 32
        %v1132 = vpop.permute.xlu0 %1131
        %1133 = vrot.lane.b32.xlu0 %v1126, 32
        %v1134 = vpop.permute.xlu0 %1133
        %v1137 = vmul.f32 %v1123, %v1132
        %v1138 = vmul.f32 %v1124, %v1134
        %1141 = vrot.lane.b32.xlu0 %v1137, 32
        %v1142 = vpop.permute.xlu0 %1141
        %1143 = vrot.lane.b32.xlu0 %v1138, 32
        %v1144 = vpop.permute.xlu0 %1143
        %v1147 = vadd.f32 %v1127, %v1142
        %v1148 = vadd.f32 %v1128, %v1144
        %v1149 = vtanh.pop %v1147
        %v1150 = vtanh.pop %v1148
        %1153 = vrot.lane.b32.xlu0 %v1149, 32
        %v1154 = vpop.permute.xlu0 %1153
        %1155 = vrot.lane.b32.xlu0 %v1150, 32
        %v1156 = vpop.permute.xlu0 %1155
        %v1159 = vmul.f32 %v1123, %v1154
        %v1160 = vmul.f32 %v1124, %v1156
        %1163 = vrot.lane.b32.xlu0 %v1159, 64
        %v1164 = vpop.permute.xlu0 %1163
        %1165 = vrot.lane.b32.xlu0 %v1160, 64
        %v1166 = vpop.permute.xlu0 %1165
        %s1169 = scalar_lea.vmem %s274, 112 [#allocation5]
        %1170 = vst.msk [vmem:[%s1169] sm:$0xff] %vm469, %v1164
        %1171 = vst.msk [vmem:[%s1169 + $0x8] sm:$0xff] %vm469, %v1166
        %1172 = vst.msk [vmem:[#allocation2] sm:$0xff] %vm469, %v1164
        %1173 = vst.msk [vmem:[#allocation2 + $0x8] sm:$0xff] %vm469, %v1166
        %1176 = vrot.lane.b32.xlu0 %v1147, 96
        %v1177 = vpop.permute.xlu0 %1176
        %1178 = vrot.lane.b32.xlu0 %v1148, 96
        %v1179 = vpop.permute.xlu0 %1178
        %1182 = vst.msk [vmem:[#allocation3] sm:$0xff] %vm469, %v1177
        %1183 = vst.msk [vmem:[#allocation3 + $0x8] sm:$0xff] %vm469, %v1179
        %p1184 = scmp.eq.s32.totalorder %s27, 1
        // Predicated region
        $region41: #{tpu_custom_call.1} parent=35 // pred_check
          %p1185 = pneg %p1184
        $region42: #{tpu_custom_call.1} parent=35 // pred_check_branch
          %1187 = sbr.rel (%p1185) target = $region44
        $region43: #{tpu_custom_call.1} parent=35 // pred_region
          %1188 = vst.msk [vmem:[#allocation7] sm:$0xff] %vm469, %v1164
          %1189 = vst.msk [vmem:[#allocation7 + $0x8] sm:$0xff] %vm469, %v1166
          %1190 = vst.msk [vmem:[#allocation9] sm:$0xff] %vm469, %v1177
          %1191 = vst.msk [vmem:[#allocation9 + $0x8] sm:$0xff] %vm469, %v1179
        $region44: #{tpu_custom_call.1} parent=35 // pred_fallthru
          _
        %s1192 = sand.u32 %s135, 1
        %s1193 = scalar_lea.sflag [#allocation6], %s1192
        %s1194 = sand.u32 %s135, 1
        %s1195 = smul.addr %s1194, 128
        %s1196 = scalar_lea.vmem [#allocation5], %s1195
        // Predicated region
        $region45: #{tpu_custom_call.1} parent=35 // pred_check
          %p1197 = pneg %p145
        $region46: #{tpu_custom_call.1} parent=35 // pred_check_branch
          %1199 = sbr.rel (%p1197) target = $region48
        $region47: #{tpu_custom_call.1} parent=35 // pred_region
          %s1200 = smul.u32 8, %s27
          %s1201 = smul.u32 2, %s26
          %1203 = vsyncadd %s1193, 0
          %s1204 = smul.addr %s1200, 2
          %s1205 = sadd.s32 %s1201, %s1204
          %s1206 = smul.addr %s1205, 8
          %s1207 = scalar_lea.hbm %s4, %s1206
          %s1208 = sshll.u32 %s1196, 4
          %s1209 = int_to_ptr.vmem [resolvable:$true] %s1208
          %s1210 = sshll.u32 %s1207, 4
          %s1211 = int_to_ptr.hbm [resolvable:$true] %s1210
          %1216 = dma.vmem_to_hbm [thread:$0]  %s1209, 2048, %s1211, %s1193, 128, 128, 8
        $region48: #{tpu_custom_call.1} parent=35 // pred_fallthru
          _
        // Predicated region
        $region49: #{tpu_custom_call.1} parent=35 // pred_check
          %p1217 = pneg %p171
        $region50: #{tpu_custom_call.1} parent=35 // pred_check_branch
          %1219 = sbr.rel (%p1217) target = $region52
        $region51: #{tpu_custom_call.1} parent=35 // pred_region
          %s1220 = smul.u32 2, %s26
          %1222 = vsyncadd [#allocation8], 0
          %s1223 = smul.addr %s1220, 8
          %s1224 = scalar_lea.hbm %s5, %s1223
          %s1225 = sshll.u32 [#allocation7], 4
          %s1226 = int_to_ptr.vmem [resolvable:$true] %s1225
          %s1227 = sshll.u32 %s1224, 4
          %s1228 = int_to_ptr.hbm [resolvable:$true] %s1227
          %1233 = dma.vmem_to_hbm [thread:$0]  %s1226, 256, %s1228, [#allocation8], 128, 128, 8
        $region52: #{tpu_custom_call.1} parent=35 // pred_fallthru
          _
        // Predicated region
        $region53: #{tpu_custom_call.1} parent=35 // pred_check
          %p1234 = pneg %p197
        $region54: #{tpu_custom_call.1} parent=35 // pred_check_branch
          %1236 = sbr.rel (%p1234) target = $region56
        $region55: #{tpu_custom_call.1} parent=35 // pred_region
          %s1237 = smul.u32 2, %s26
          %1239 = vsyncadd [#allocation8], 0
          %s1240 = smul.addr %s1237, 8
          %s1241 = scalar_lea.hbm %s6, %s1240
          %s1242 = sshll.u32 [#allocation9], 4
          %s1243 = int_to_ptr.vmem [resolvable:$true] %s1242
          %s1244 = sshll.u32 %s1241, 4
          %s1245 = int_to_ptr.hbm [resolvable:$true] %s1244
          %1250 = dma.vmem_to_hbm [thread:$0]  %s1243, 256, %s1245, [#allocation8], 128, 128, 8
        $region56: #{tpu_custom_call.1} parent=35 // pred_fallthru
          _
        // Predicated region
        $region57: #{tpu_custom_call.1} parent=35 // pred_check
          %p1251 = pneg %p171
        $region58: #{tpu_custom_call.1} parent=35 // pred_check_branch
          %1253 = sbr.rel (%p1251) target = $region60
        $region59: #{tpu_custom_call.1} parent=35 // pred_region
          %1255 = dma.done [#allocation8], 256
        $region60: #{tpu_custom_call.1} parent=35 // pred_fallthru
          _
        // Predicated region
        $region61: #{tpu_custom_call.1} parent=35 // pred_check
          %p1256 = pneg %p197
        $region62: #{tpu_custom_call.1} parent=35 // pred_check_branch
          %1258 = sbr.rel (%p1256) target = $region64
        $region63: #{tpu_custom_call.1} parent=35 // pred_region
          %1260 = dma.done [#allocation8], 256
        $region64: #{tpu_custom_call.1} parent=35 // pred_fallthru
          _
      $region36: #{tpu_custom_call.1} parent=5 // pred_fallthru
        _
      %p1261 = scmp.le.s32.totalorder 2, %s17
      // Predicated region
      $region65: #{tpu_custom_call.1} parent=5 // pred_check
        %p1262 = pneg %p1261
      $region66: #{tpu_custom_call.1} parent=5 // pred_check_branch
        %1264 = sbr.rel (%p1262) target = $region68
      $region67: #{tpu_custom_call.1} parent=5 // pred_region
        %s1265 = ssub.s32 %s17, 2
        // Predicated region
        $region69: #{tpu_custom_call.1} parent=67 // pred_check
          %p1266 = pneg %p151
        $region70: #{tpu_custom_call.1} parent=67 // pred_check_branch
          %1268 = sbr.rel (%p1266) target = $region72
        $region71: #{tpu_custom_call.1} parent=67 // pred_region
          %s1269 = sand.u32 %s136, 1
          %s1270 = scalar_lea.sflag [#allocation6], %s1269
          %s1271 = sand.u32 %s136, 1
          %s1272 = smul.addr %s1271, 128
          %s1273 = scalar_lea.vmem [#allocation5], %s1272
          %1275 = dma.done %s1270, 2048
        $region72: #{tpu_custom_call.1} parent=67 // pred_fallthru
          _
      $region68: #{tpu_custom_call.1} parent=5 // pred_fallthru
        _
    $region6: #{tpu_custom_call.1} parent=1 // loop_footer
      %s21 = sadd.s32 1, %s17
    $region7: #{tpu_custom_call.1} parent=1 // loop_footer_branch
      %16 = sbr.rel target = $region3
    $region8: #{tpu_custom_call.1} parent=1 // loop_exit
      _
    %1276 = vsyncpa [#allocation6], 1
    %s1277 = scalar_lea.sflag [#allocation6], 1
    %1278 = vsyncpa %s1277, 1
    %1279 = vsyncpa [#allocation8], 1

</llo_original>
